<compile_context>
chip_gen: v7x
topology: tpu7x:2x2x1
jax: 0.10.0
libtpu: 0.0.40
codegen_flags: <defaults>
</compile_context>

<pallas_src>
import functools
import math

import jax
import jax.numpy as jnp
from jax import lax
from jax.experimental import pallas as pl
from jax.experimental.pallas import tpu as pltpu

FRN_EPS = 1e-6                      # FilterResponseNormalization eps

try:  # generation-aware scoped-VMEM limit (v7x has 64 MiB, v5e/v6e 128 MiB)
    _VMEM_CAP = int(getattr(pltpu.get_tpu_info(), "vmem_capacity_bytes",
                            128 * 1024 * 1024))
except Exception:  # pragma: no cover - conservative fallback
    _VMEM_CAP = 128 * 1024 * 1024
_VMEM_LIMIT = int(min(max(_VMEM_CAP // 2, 16 * 1024 * 1024), 64 * 1024 * 1024))

_H_BUDGET_DW = 4 * 1024 * 1024      # depthwise input block budget (bytes)
_H_BUDGET_MP = 2 * 1024 * 1024      # maxpool per-plane block budget (bytes)


def _ru(x, m):
    return ((x + m - 1) // m) * m


def _pick_tile(n, cap, mult):
    """Largest tile <= cap, multiple of `mult`, dividing _ru(n, mult)."""
    npad = _ru(n, mult)
    best = mult
    t = mult
    lim = min(cap, npad)
    while t <= lim:
        if npad % t == 0:
            best = t
        t += mult
    return best


def _ch_tile(c):
    """Channel tile for channel-parallel kernels (never creates partial blocks)."""
    if c <= 512:
        return c
    for t in (512, 256, 128):
        if c % t == 0:
            return t
    return c


def _row_tile(m, c):
    """Row tile (multiple of 8) targeting ~2 MiB per (rows, C) block."""
    if m < 8:
        return m
    cap = (2 * 1024 * 1024) // max(4 * c, 1)
    cap = max(8, min(4096, (cap // 8) * 8))
    return min(cap, _ru(m, 8))


def _h_tile(h, row_bytes, halo, budget, cap=128):
    """Largest divisor of h (<= cap) whose halo'd block fits the byte budget."""
    best = 1
    for th in range(1, min(h, cap) + 1):
        if h % th == 0 and (th + halo) * row_bytes <= budget:
            best = th
    return best


def _h_windows(xpad, th, halo):
    """(N, H+halo, W, C) -> (N*T, th+halo, W, C) overlapping row windows.
    Reshape-free (returns the input) when a single window covers everything."""
    n, hp, wc, c = xpad.shape
    t_tiles = (hp - halo) // th
    if t_tiles <= 1:
        return xpad
    win = jnp.stack([xpad[:, t * th:t * th + th + halo] for t in range(t_tiles)],
                    axis=1)
    return win.reshape(n * t_tiles, th + halo, wc, c)


# ----------------------------------------------------------------------------
# Matmul kernels (1x1 / im2col convs), with fused bias / input-ReLU / FRN stats
# ----------------------------------------------------------------------------
def _matmul_kernel(*refs, relu_a, has_bias, want_ssq):
    a_ref, b_ref = refs[0], refs[1]
    bias_ref = refs[2] if has_bias else None
    o_ref = refs[2 + int(has_bias)]
    ssq_ref = refs[3 + int(has_bias)] if want_ssq else None
    k = pl.program_id(2)

    @pl.when(k == 0)
    def _():
        o_ref[...] = jnp.zeros_like(o_ref)

    a = a_ref[...]
    if relu_a:
        a = jnp.maximum(a, 0)
    o_ref[...] += jnp.dot(a.astype(jnp.bfloat16), b_ref[...],
                          preferred_element_type=jnp.float32)

    if has_bias or want_ssq:
        @pl.when(k == pl.num_programs(2) - 1)
        def _():
            acc = o_ref[...]
            if has_bias:
                acc = acc + bias_ref[...]
                o_ref[...] = acc
            if want_ssq:
                # column sum of squares (FRN nu2 numerator); padded rows are
                # exact zeros (FRN-feeding convs are bias-free).
                ssq_ref[...] = jnp.sum(acc * acc, axis=0, keepdims=True)[None]


@functools.partial(jax.jit, static_argnames=("relu_a", "want_ssq"))
def matmul_pallas(a, b, bias=None, *, relu_a=False, want_ssq=False):
    """(M, Ka) @ (Kb, N) (+bias) with Ka >= Kb (extra A columns must be zero).
    bf16 MXU operands, f32 accumulation in the resident output block."""
    M, Ka = a.shape
    Kb, N = b.shape
    assert Ka >= Kb
    tm = _pick_tile(M, 512, 16)
    tn = _pick_tile(N, 512, 128)
    tk = _pick_tile(Ka, 768, 128)
    Mp, Kp, Np = _ru(M, tm), _ru(Ka, tk), _ru(N, tn)
    if a.dtype != jnp.bfloat16 and Np // tn >= 3:
        # A is re-read once per output-column tile; pre-cast when reuse >= 3
        # so the extra cast pass is amortised (halves A's per-tile DMA bytes).
        a = a.astype(jnp.bfloat16)
    if Mp > M or Kp > Ka:
        a = jnp.pad(a, ((0, Mp - M), (0, Kp - Ka)))
    b_p = jnp.pad(b.astype(jnp.bfloat16), ((0, Kp - Kb), (0, Np - N)))

    has_bias = bias is not None
    inputs = [a, b_p]
    in_specs = [pl.BlockSpec((tm, tk), lambda i, j, k: (i, k)),
                pl.BlockSpec((tk, tn), lambda i, j, k: (k, j))]
    if has_bias:
        inputs.append(jnp.pad(bias.astype(jnp.float32).reshape(1, N),
                              ((0, 0), (0, Np - N))))
        in_specs.append(pl.BlockSpec((1, tn), lambda i, j, k: (0, j)))

    o_shape = jax.ShapeDtypeStruct((Mp, Np), jnp.float32)
    o_spec = pl.BlockSpec((tm, tn), lambda i, j, k: (i, j))
    if want_ssq:
        out_shape = (o_shape,
                     jax.ShapeDtypeStruct((Mp // tm, 1, Np), jnp.float32))
        out_specs = (o_spec, pl.BlockSpec((1, 1, tn), lambda i, j, k: (i, 0, j)))
    else:
        out_shape, out_specs = o_shape, o_spec

    res = pl.pallas_call(
        functools.partial(_matmul_kernel, relu_a=relu_a, has_bias=has_bias,
                          want_ssq=want_ssq),
        out_shape=out_shape,
        grid=(Mp // tm, Np // tn, Kp // tk),
        in_specs=in_specs,
        out_specs=out_specs,
        compiler_params=pltpu.CompilerParams(
            dimension_semantics=("parallel", "parallel", "arbitrary"),
            vmem_limit_bytes=_VMEM_LIMIT),
    )(*inputs)
    if want_ssq:
        out, ssq = res
        return out[:M, :N], jnp.sum(ssq, axis=(0, 1))[:N]
    return res[:M, :N]


def _concat_mm_kernel(*refs, n_in, want_ssq):
    w_ref = refs[n_in]
    o_ref = refs[n_in + 1]
    o_ref[...] = jnp.dot(refs[0][...].astype(jnp.bfloat16), w_ref[0],
                         preferred_element_type=jnp.float32)
    for t in range(1, n_in):
        o_ref[...] += jnp.dot(refs[t][...].astype(jnp.bfloat16), w_ref[t],
                              preferred_element_type=jnp.float32)
    if want_ssq:
        acc = o_ref[...]
        refs[n_in + 2][...] = jnp.sum(acc * acc, axis=0, keepdims=True)[None]


@functools.partial(jax.jit, static_argnames=("want_ssq",))
def concat_matmul_pallas(xs, w, *, want_ssq=False):
    """out = concat(xs, -1) @ w without materializing the channel concat.
    xs: list of (M, Ck) arrays (equal Ck, Ck multiple of 128); w: (n*Ck, N)."""
    n_in = len(xs)
    M, Ck = xs[0].shape
    N = w.shape[1]
    tm = _pick_tile(M, 256, 16)
    tn = _pick_tile(N, 512, 128)
    Mp, Np = _ru(M, tm), _ru(N, tn)
    xs_p = [jnp.pad(x, ((0, Mp - M), (0, 0))) if Mp > M else x for x in xs]
    w_p = jnp.pad(w.astype(jnp.bfloat16).reshape(n_in, Ck, N),
                  ((0, 0), (0, 0), (0, Np - N)))
    in_specs = [pl.BlockSpec((tm, Ck), lambda i, j: (i, 0))
                for _ in range(n_in)]
    in_specs.append(pl.BlockSpec((n_in, Ck, tn), lambda i, j: (0, 0, j)))
    o_shape = jax.ShapeDtypeStruct((Mp, Np), jnp.float32)
    o_spec = pl.BlockSpec((tm, tn), lambda i, j: (i, j))
    if want_ssq:
        out_shape = (o_shape, jax.ShapeDtypeStruct((Mp // tm, 1, Np), jnp.float32))
        out_specs = (o_spec, pl.BlockSpec((1, 1, tn), lambda i, j: (i, 0, j)))
    else:
        out_shape, out_specs = o_shape, o_spec
    res = pl.pallas_call(
        functools.partial(_concat_mm_kernel, n_in=n_in, want_ssq=want_ssq),
        out_shape=out_shape, grid=(Mp // tm, Np // tn),
        in_specs=in_specs, out_specs=out_specs,
        compiler_params=pltpu.CompilerParams(
            dimension_semantics=("parallel", "parallel"),
            vmem_limit_bytes=_VMEM_LIMIT),
    )(*xs_p, w_p)
    if want_ssq:
        out, ssq = res
        return out[:M, :N], jnp.sum(ssq, axis=(0, 1))[:N]
    return res[:M, :N]


# ----------------------------------------------------------------------------
# Depthwise 3x3 (stride 1, pad 1) with fused input ReLU + fused FRN statistics
# ----------------------------------------------------------------------------
def _dw3x3_kernel(x_ref, w_ref, o_ref, ssq_ref, *, relu):
    x = x_ref[0]                         # (th+2, W+2, tc), zero padded
    if relu:
        x = jnp.maximum(x, 0.0)          # fused leading ReLU (SepConvBlock)
    w = w_ref[...]                       # (9, tc)
    th = o_ref.shape[1]
    W = o_ref.shape[2]
    # Column-shifted planes are built once per block (instead of per tap) so
    # the per-tap slices only move along the cheap row axis.
    x0 = x[:, 0:W, :]
    x1 = x[:, 1:W + 1, :]
    x2 = x[:, 2:W + 2, :]
    acc = jnp.zeros(o_ref.shape[1:], jnp.float32)
    for i in range(3):
        acc = acc + x0[i:i + th] * w[3 * i + 0]
        acc = acc + x1[i:i + th] * w[3 * i + 1]
        acc = acc + x2[i:i + th] * w[3 * i + 2]
    o_ref[0] = acc
    ssq_ref[...] = jnp.sum(acc * acc, axis=(0, 1), keepdims=True)[None]


@functools.partial(jax.jit, static_argnames=("relu",))
def depthwise3x3_pallas(x, w, *, relu=False):
    """3x3 depthwise conv, s1/p1, fused input ReLU, fused FRN sum(x^2).
    Returns (out, per-image channel sum of squares of shape (N,1,C))."""
    N, H, W, C = x.shape
    tc = _ch_tile(C)
    th = _h_tile(H, (W + 2) * tc * 4, halo=2, budget=_H_BUDGET_DW)
    T = H // th
    xp = jnp.pad(x, ((0, 0), (1, 1), (1, 1), (0, 0)))
    xw = _h_windows(xp, th, 2)               # (N*T, th+2, W+2, C)
    out, ssq = pl.pallas_call(
        functools.partial(_dw3x3_kernel, relu=relu),
        out_shape=(jax.ShapeDtypeStruct((N, H, W, C), jnp.float32),
                   jax.ShapeDtypeStruct((N, T, 1, C), jnp.float32)),
        grid=(N, T, C // tc),
        in_specs=[pl.BlockSpec((1, th + 2, W + 2, tc),
                               lambda n, t, c: (n * T + t, 0, 0, c)),
                  pl.BlockSpec((9, tc), lambda n, t, c: (0, c))],
        out_specs=(pl.BlockSpec((1, th, W, tc), lambda n, t, c: (n, t, 0, c)),
                   pl.BlockSpec((1, 1, 1, tc), lambda n, t, c: (n, t, 0, c))),
        compiler_params=pltpu.CompilerParams(
            dimension_semantics=("parallel", "parallel", "parallel"),
            vmem_limit_bytes=_VMEM_LIMIT),
    )(xw, w)
    return out, jnp.sum(ssq, axis=1)         # (N, 1, C)


# ----------------------------------------------------------------------------
# FRN: row-tiled reduction (fallback) + apply pass with fused ReLU / residual
# ----------------------------------------------------------------------------
def _rowsum_kernel(x_ref, o_ref, *, square, rows, tr):
    @pl.when(pl.program_id(1) == 0)
    def _():
        o_ref[...] = jnp.zeros_like(o_ref)

    x = x_ref[...]                       # (1, tr, C)
    if square:
        x = x * x
    if rows % tr:                        # mask garbage rows of the edge block
        ridx = pl.program_id(1) * tr + lax.broadcasted_iota(
            jnp.int32, (1, tr, 1), 1)
        x = jnp.where(ridx < rows, x, 0.0)
    o_ref[...] += jnp.sum(x, axis=1, keepdims=True)


@functools.partial(jax.jit, static_argnames=("square",))
def _rowsum_pallas(x3, square):
    """x3: (N, M, C) -> (N, 1, C) sum over rows (optionally of x**2)."""
    N, M, C = x3.shape
    tr = _row_tile(M, C)
    return pl.pallas_call(
        functools.partial(_rowsum_kernel, square=square, rows=M, tr=tr),
        out_shape=jax.ShapeDtypeStruct((N, 1, C), jnp.float32),
        grid=(N, pl.cdiv(M, tr)),
        in_specs=[pl.BlockSpec((1, tr, C), lambda n, t: (n, t, 0))],
        out_specs=pl.BlockSpec((1, 1, C), lambda n, t: (n, 0, 0)),
        compiler_params=pltpu.CompilerParams(
            dimension_semantics=("parallel", "arbitrary"),
            vmem_limit_bytes=_VMEM_LIMIT),
    )(x3)


def _frn_apply_kernel(*refs, relu, has_res, res_relu, inv_count):
    x_ref, ss_ref, g_ref, b_ref, t_ref = refs[:5]
    o_ref = refs[-1]
    nu2 = ss_ref[...] * inv_count                   # (1, 1, C) mean of x^2
    scale = lax.rsqrt(nu2 + abs(FRN_EPS))
    y = jnp.maximum(g_ref[...] * (x_ref[...] * scale) + b_ref[...], t_ref[...])
    if relu:
        y = jnp.maximum(y, 0.0)
    if has_res:
        r = refs[5][...]
        if res_relu:
            r = jnp.maximum(r, 0.0)     # PyTorch inplace-ReLU'd residual
        y = y + r
    o_ref[...] = y


@functools.partial(jax.jit, static_argnames=("relu", "residual_relu"))
def frn_pallas(x, gamma, beta, tau, *, relu=False, residual=None,
               residual_relu=False, ss=None):
    """FilterResponseNormalization.  `ss` is the precomputed per-image channel
    sum of squares (fused into the producer kernels); if None it is computed
    with a row-tiled reduction.  Optional fused trailing ReLU / residual add
    (optionally ReLU'ing the residual, matching PyTorch inplace semantics)."""
    N, H, W, C = x.shape
    M = H * W
    x3 = x.reshape(N, M, C)
    if ss is None:
        ss = _rowsum_pallas(x3, square=True)        # (N, 1, C)
    gp = gamma.reshape(1, 1, C)
    bp = beta.reshape(1, 1, C)
    tp = tau.reshape(1, 1, C)
    tr = _row_tile(M, C)
    has_res = residual is not None
    xspec = pl.BlockSpec((1, tr, C), lambda n, t: (n, t, 0))
    sspec = pl.BlockSpec((1, 1, C), lambda n, t: (n, 0, 0))
    pspec = pl.BlockSpec((1, 1, C), lambda n, t: (0, 0, 0))
    in_specs = [xspec, sspec, pspec, pspec, pspec]
    args = [x3, ss, gp, bp, tp]
    if has_res:
        in_specs.append(xspec)
        args.append(residual.reshape(N, M, C))
    out = pl.pallas_call(
        functools.partial(_frn_apply_kernel, relu=relu, has_res=has_res,
                          res_relu=residual_relu, inv_count=1.0 / float(M)),
        out_shape=jax.ShapeDtypeStruct((N, M, C), jnp.float32),
        grid=(N, pl.cdiv(M, tr)),
        in_specs=in_specs,
        out_specs=xspec,
        compiler_params=pltpu.CompilerParams(
            dimension_semantics=("parallel", "parallel"),
            vmem_limit_bytes=_VMEM_LIMIT),
    )(*args)
    return out.reshape(N, H, W, C)


@jax.jit
def global_avg_pool_pallas(x):
    """AdaptiveAvgPool2d((1,1)) via the row-tiled reduction kernel."""
    N, H, W, C = x.shape
    s = _rowsum_pallas(x.reshape(N, H * W, C), square=False)
    return (s * (1.0 / float(H * W))).reshape(N, 1, 1, C)


# ----------------------------------------------------------------------------
# MaxPool 3x3 / stride 2 / pad 1, computed at stride 2 via parity planes,
# row-tiled with halo windows, with the skip-conv identity add fused in.
# ----------------------------------------------------------------------------
def _maxpool_add_kernel(ee_ref, eo_ref, oe_ref, oo_ref, id_ref, o_ref):
    th = o_ref.shape[1]
    Wo = o_ref.shape[2]
    ee = ee_ref[0]             # (th+1, Wo+1, tc)  even rows / even cols
    eo = eo_ref[0]             # (th+1, Wo,   tc)  even rows / odd  cols
    oe = oe_ref[0]             # (th,   Wo+1, tc)  odd  rows / even cols
    oo = oo_ref[0]             # (th,   Wo,   tc)  odd  rows / odd  cols
    eeL, eeR = ee[:, :Wo, :], ee[:, 1:, :]
    oeL, oeR = oe[:, :Wo, :], oe[:, 1:, :]
    m = oo                                    # window center: always interior
    m = jnp.maximum(m, eeL[:th])
    m = jnp.maximum(m, eeL[1:])
    m = jnp.maximum(m, eeR[:th])
    m = jnp.maximum(m, eeR[1:])
    m = jnp.maximum(m, eo[:th])
    m = jnp.maximum(m, eo[1:])
    m = jnp.maximum(m, oeL)
    m = jnp.maximum(m, oeR)
    o_ref[0] = m + id_ref[0]                  # fused residual (skip conv) add


@jax.jit
def maxpool3x3_s2_add_pallas(x, identity):
    N, H, W, C = x.shape
    Ho, Wo = identity.shape[1], identity.shape[2]
    tc = _ch_tile(C)
    th = _h_tile(Ho, (Wo + 1) * tc * 4, halo=1, budget=_H_BUDGET_MP)
    T = Ho // th
    xp = jnp.pad(x, ((0, 0), (1, 1), (1, 1), (0, 0)),
                 constant_values=-jnp.inf)
    ee = _h_windows(xp[:, 0::2, 0::2, :][:, :Ho + 1, :Wo + 1, :], th, 1)
    eo = _h_windows(xp[:, 0::2, 1::2, :][:, :Ho + 1, :Wo, :], th, 1)
    oe = xp[:, 1::2, 0::2, :][:, :Ho, :Wo + 1, :]
    oo = xp[:, 1::2, 1::2, :][:, :Ho, :Wo, :]

    def win_spec(w_):
        return pl.BlockSpec((1, th + 1, w_, tc),
                            lambda n, t, c: (n * T + t, 0, 0, c))

    def row_spec(w_):
        return pl.BlockSpec((1, th, w_, tc), lambda n, t, c: (n, t, 0, c))

    return pl.pallas_call(
        _maxpool_add_kernel,
        out_shape=jax.ShapeDtypeStruct((N, Ho, Wo, C), jnp.float32),
        grid=(N, T, C // tc),
        in_specs=[win_spec(Wo + 1), win_spec(Wo),
                  row_spec(Wo + 1), row_spec(Wo), row_spec(Wo)],
        out_specs=row_spec(Wo),
        compiler_params=pltpu.CompilerParams(
            dimension_semantics=("parallel", "parallel", "parallel"),
            vmem_limit_bytes=_VMEM_LIMIT),
    )(ee, eo, oe, oo, identity)


# ----------------------------------------------------------------------------
# Plain-JAX glue
# ----------------------------------------------------------------------------
def conv2d(x, w_mat, k, stride=1, padding=0, dilation=1, bias=None,
           relu_in=False, want_ssq=False):
    """General conv: im2col (XLA glue, bf16 patches, K padding absorbed into
    the patch concat) + Pallas MXU matmul with fused bias / input-ReLU / FRN
    statistics.  Returns `out` or `(out, ss)` when want_ssq."""
    # TODO(synk): replace im2col with an implicit-GEMM conv (manual halo DMA)
    # for the dilated ASPP / decoder 3x3 convolutions.
    N, H, W, C = x.shape
    Cout = w_mat.shape[1]
    Ho = (H + 2 * padding - dilation * (k - 1) - 1) // stride + 1
    Wo = (W + 2 * padding - dilation * (k - 1) - 1) // stride + 1
    if k > 1:
        xb = x.astype(jnp.bfloat16)      # halve im2col patch HBM traffic
        xp = jnp.pad(xb, ((0, 0), (padding, padding), (padding, padding), (0, 0)))
        cols = []
        for i in range(k):
            for j in range(k):
                cols.append(
                    xp[:, i * dilation:i * dilation + (Ho - 1) * stride + 1:stride,
                       j * dilation:j * dilation + (Wo - 1) * stride + 1:stride, :])
        k_raw = k * k * C
        k_pad = _ru(k_raw, 128) - k_raw
        if k_pad:                        # absorb K padding into the concat
            cols.append(jnp.zeros((N, Ho, Wo, k_pad), jnp.bfloat16))
        a = jnp.concatenate(cols, axis=-1).reshape(N * Ho * Wo, k_raw + k_pad)
    else:
        xs = x
        if padding:
            xs = jnp.pad(xs, ((0, 0), (padding,) * 2, (padding,) * 2, (0, 0)))
        if stride > 1:
            xs = xs[:, ::stride, ::stride, :]
        a = xs.reshape(N * Ho * Wo, C)

    fuse = want_ssq and (N == 1) and (bias is None)
    if fuse:
        out, colssq = matmul_pallas(a, w_mat, bias, relu_a=relu_in,
                                    want_ssq=True)
        ss = colssq.reshape(1, 1, Cout)
    else:
        out = matmul_pallas(a, w_mat, bias, relu_a=relu_in, want_ssq=False)
        ss = None
    out = out.reshape(N, Ho, Wo, Cout)
    if want_ssq:
        return out, ss
    return out


def bilinear_align_corners(x, oh, ow):
    """F.interpolate(mode='bilinear', align_corners=True) on NHWC (glue)."""
    N, H, W, C = x.shape
    if H == oh and W == ow:
        return x
    if H == 1 and W == 1:
        return jnp.broadcast_to(x, (N, oh, ow, C))
    ys = (jnp.arange(oh, dtype=jnp.float32) * ((H - 1) / (oh - 1))
          if oh > 1 else jnp.zeros((oh,), jnp.float32))
    xs = (jnp.arange(ow, dtype=jnp.float32) * ((W - 1) / (ow - 1))
          if ow > 1 else jnp.zeros((ow,), jnp.float32))
    y0 = jnp.clip(jnp.floor(ys).astype(jnp.int32), 0, H - 1)
    x0 = jnp.clip(jnp.floor(xs).astype(jnp.int32), 0, W - 1)
    y1 = jnp.clip(y0 + 1, 0, H - 1)
    x1 = jnp.clip(x0 + 1, 0, W - 1)
    wy = (ys - y0.astype(jnp.float32))[None, :, None, None]
    wx = (xs - x0.astype(jnp.float32))[None, None, :, None]
    g = lambda yi, xi: x[:, yi][:, :, xi]
    top = g(y0, x0) * (1 - wx) + g(y0, x1) * wx
    bot = g(y1, x0) * (1 - wx) + g(y1, x1) * wx
    return top * (1 - wy) + bot * wy


# ----------------------------------------------------------------------------
# Parameter construction (deterministic, shapes from the module __init__)
# ----------------------------------------------------------------------------
class _Keys:
    def __init__(self, key):
        self._key = key

    def __call__(self):
        self._key, k = jax.random.split(self._key)
        return k


def _conv_w(kg, cin, cout, k):
    fan_in = cin * k * k
    return jax.random.normal(kg(), (k * k * cin, cout),
                             jnp.float32) / math.sqrt(fan_in)


def _conv_b(kg, cout, fan_in):
    bound = 1.0 / math.sqrt(fan_in)
    return jax.random.uniform(kg(), (cout,), jnp.float32, -bound, bound)


def _dw_w(kg, c):
    return jax.random.normal(kg(), (9, c), jnp.float32) / 3.0


def _frn_p(c):
    # reset_parameters(): gamma=1, beta=0, tau=0
    return {"gamma": jnp.ones((1, 1, 1, c), jnp.float32),
            "beta": jnp.zeros((1, 1, 1, c), jnp.float32),
            "tau": jnp.zeros((1, 1, 1, c), jnp.float32)}


def _init_sep(kg, cin, cout):        # SeparableConv2d
    return {"dw": _dw_w(kg, cin), "bn": _frn_p(cin),
            "pw": _conv_w(kg, cin, cout, 1)}


def _init_scb(kg, cin, cout):        # SepConvBlock
    return {"sep": _init_sep(kg, cin, cout), "bn": _frn_p(cout)}


def _init_block(kg, c):              # Block
    return {"sc0": _init_scb(kg, c, c), "sc1": _init_scb(kg, c, c),
            "sc2": _init_scb(kg, c, c)}


def _init_down(kg, cin, cout):       # DownBlock
    return {"sc1": _init_scb(kg, cin, cout), "sc2": _init_scb(kg, cout, cout),
            "skip_w": _conv_w(kg, cin, cout, 1),
            "skip_b": _conv_b(kg, cout, cin)}


def _init_xception(kg):
    p = {"conv1_w": _conv_w(kg, 3, 32, 3), "bn1": _frn_p(32),
         "conv2_w": _conv_w(kg, 32, 64, 3), "bn2": _frn_p(64),
         "block1": _init_down(kg, 64, 128),
         "block2": _init_down(kg, 128, 256),
         "block3": _init_down(kg, 256, 728)}
    for i in range(4, 12):
        p["block%d" % i] = _init_block(kg, 728)
    p.update({"sepconv12": _init_scb(kg, 728, 728),
              "sepconv13": _init_scb(kg, 728, 1024),
              "skip15_w": _conv_w(kg, 728, 1024, 1),
              "skip15_b": _conv_b(kg, 1024, 728),
              "conv16": _init_sep(kg, 1024, 1536), "bn16": _frn_p(1536),
              "conv17": _init_sep(kg, 1536, 2048), "bn17": _frn_p(2048)})
    return p


def _init_aspp(kg):
    inp = 2048
    return {"aspp1_w": _conv_w(kg, inp, 256, 1), "aspp1_bn": _frn_p(256),
            "aspp2_w": _conv_w(kg, inp, 256, 3), "aspp2_bn": _frn_p(256),
            "aspp3_w": _conv_w(kg, inp, 256, 3), "aspp3_bn": _frn_p(256),
            "aspp4_w": _conv_w(kg, inp, 256, 3), "aspp4_bn": _frn_p(256),
            "gap_w": _conv_w(kg, inp, 256, 1), "gap_bn": _frn_p(256),
            "conv1_w": _conv_w(kg, 1280, 256, 1), "bn1": _frn_p(256)}


def _init_decoder(kg, num_classes):
    return {"conv1_w": _conv_w(kg, 128, 48, 1), "bn1": _frn_p(48),
            "lc1_w": _conv_w(kg, 304, 256, 3), "lc1_bn": _frn_p(256),
            "lc2_w": _conv_w(kg, 256, 256, 3), "lc2_bn": _frn_p(256),
            "lc3_w": _conv_w(kg, 256, num_classes, 1),
            "lc3_b": _conv_b(kg, num_classes, 256)}


def init_deeplab(key, num_classes=1):
    kg = _Keys(key)
    return {"backbone": _init_xception(kg),
            "aspp": _init_aspp(kg),
            "decoder": _init_decoder(kg, num_classes)}


# ----------------------------------------------------------------------------
# Module forwards
# ----------------------------------------------------------------------------
def frn(x, p, relu=False, residual=None, residual_relu=False, ss=None):
    return frn_pallas(x, p["gamma"], p["beta"], p["tau"], relu=relu,
                      residual=residual, residual_relu=residual_relu, ss=ss)


def conv_frn(x, w_mat, k, frnp, stride=1, padding=0, dilation=1,
             relu_in=False, relu_out=False, residual=None, residual_relu=False):
    y, ss = conv2d(x, w_mat, k, stride=stride, padding=padding,
                   dilation=dilation, bias=None, relu_in=relu_in,
                   want_ssq=True)
    return frn(y, frnp, relu=relu_out, residual=residual,
               residual_relu=residual_relu, ss=ss)


def separable_conv(x, p, relu_in=False, want_ssq=False):
    # SeparableConv2d: [fused ReLU] depthwise 3x3 (s1,p1) -> FRN -> pointwise
    y, ss = depthwise3x3_pallas(x, p["dw"], relu=relu_in)
    y = frn(y, p["bn"], ss=ss)
    return conv2d(y, p["pw"], 1, want_ssq=want_ssq)


def sepconv_block(x, p, residual=None, residual_relu=False):
    # SepConvBlock: ReLU -> SeparableConv2d -> FRN.  The leading (inplace)
    # ReLU is fused into the depthwise kernel, FRN statistics are fused into
    # the producing kernels, and the optional residual add (optionally of the
    # ReLU'd input) is fused into the trailing FRN apply pass.
    y, ss = depthwise3x3_pallas(x, p["sep"]["dw"], relu=True)
    y = frn(y, p["sep"]["bn"], ss=ss)
    y, ss = conv2d(y, p["sep"]["pw"], 1, want_ssq=True)
    return frn(y, p["bn"], residual=residual, residual_relu=residual_relu, ss=ss)


def block_fwd(x, p):
    # Block: the inplace ReLU inside sepconv1 mutates `inp`, so the residual
    # actually adds relu(inp) in PyTorch; fused as residual_relu in the FRN.
    y = sepconv_block(x, p["sc0"])
    y = sepconv_block(y, p["sc1"])
    return sepconv_block(y, p["sc2"], residual=x, residual_relu=True)


def down_block_fwd(x, p):
    # skip conv reads the un-ReLU'd input (identity computed before the
    # inplace mutation); bias fused into the matmul epilogue.
    identity = conv2d(x, p["skip_w"], 1, stride=2, padding=0,
                      bias=p["skip_b"])
    y = sepconv_block(x, p["sc1"])
    y = sepconv_block(y, p["sc2"])
    return maxpool3x3_s2_add_pallas(y, identity)    # pool + add fused


def xception_fwd(x, p):
    x = conv_frn(x, p["conv1_w"], 3, p["bn1"], stride=2, padding=1,
                 relu_out=True)                    # conv1 + bn1 + relu1
    x = conv_frn(x, p["conv2_w"], 3, p["bn2"], stride=1, padding=1)
    x = down_block_fwd(x, p["block1"])
    # block2's first inplace ReLU mutates this aliased tensor in PyTorch, so
    # the low-level feature reaching the decoder is relu(block1 output); the
    # ReLU is fused into the decoder's 1x1 conv (relu_in=True) instead of a
    # standalone pass.
    low = x
    x = down_block_fwd(x, p["block2"])
    x = down_block_fwd(x, p["block3"])
    for i in range(4, 12):
        x = block_fwd(x, p["block%d" % i])
    # sepconv12's inplace ReLU mutates x before skip15 is applied; the skip
    # conv therefore sees relu(x), fused via relu_in on its matmul.
    out = sepconv_block(x, p["sepconv12"])
    skip = conv2d(x, p["skip15_w"], 1, bias=p["skip15_b"], relu_in=True)
    x = sepconv_block(out, p["sepconv13"], residual=skip)   # fused out + skip
    y, ss = separable_conv(x, p["conv16"], want_ssq=True)
    x = frn(y, p["bn16"], relu=True, ss=ss)
    y, ss = separable_conv(x, p["conv17"], want_ssq=True)
    x = frn(y, p["bn17"], relu=True, ss=ss)
    return x, low


def aspp_fwd(x, p):
    N, H, W, _ = x.shape
    x1 = conv_frn(x, p["aspp1_w"], 1, p["aspp1_bn"], relu_out=True)
    x2 = conv_frn(x, p["aspp2_w"], 3, p["aspp2_bn"], padding=6, dilation=6,
                  relu_out=True)
    x3 = conv_frn(x, p["aspp3_w"], 3, p["aspp3_bn"], padding=12, dilation=12,
                  relu_out=True)
    x4 = conv_frn(x, p["aspp4_w"], 3, p["aspp4_bn"], padding=18, dilation=18,
                  relu_out=True)
    x5 = global_avg_pool_pallas(x)
    x5 = conv_frn(x5, p["gap_w"], 1, p["gap_bn"], relu_out=True)
    x5 = bilinear_align_corners(x5, H, W)
    # 1280 -> 256 1x1 fuse conv without materializing the channel concat.
    M = N * H * W
    branches = [b.reshape(M, 256) for b in (x1, x2, x3, x4, x5)]
    if N == 1:
        xc, colssq = concat_matmul_pallas(branches, p["conv1_w"], want_ssq=True)
        ss = colssq.reshape(1, 1, 256)
    else:
        xc = concat_matmul_pallas(branches, p["conv1_w"])
        ss = None
    xc = frn(xc.reshape(N, H, W, 256), p["bn1"], relu=True, ss=ss)
    # TODO(synk): Dropout(0.5) is identity here (inference/eval semantics).
    return xc


def decoder_fwd(x, low, p):
    # `low` arrives un-ReLU'd; the PyTorch inplace ReLU is fused via relu_in.
    low = conv_frn(low, p["conv1_w"], 1, p["bn1"], relu_in=True, relu_out=True)
    x = bilinear_align_corners(x, low.shape[1], low.shape[2])
    x = jnp.concatenate([x, low], axis=-1)
    x = conv_frn(x, p["lc1_w"], 3, p["lc1_bn"], padding=1, relu_out=True)
    # TODO(synk): Dropout(0.5)/Dropout(0.1) are identity (inference semantics).
    x = conv_frn(x, p["lc2_w"], 3, p["lc2_bn"], padding=1, relu_out=True)
    return conv2d(x, p["lc3_w"], 1, bias=p["lc3_b"])


def deeplab_forward(params, x_nchw):
    # layout: NCHW (PyTorch convention) in/out, NHWC inside.
    x = jnp.transpose(x_nchw, (0, 2, 3, 1)).astype(jnp.float32)
    feat, low = xception_fwd(x, params["backbone"])
    y = aspp_fwd(feat, params["aspp"])
    y = decoder_fwd(y, low, params["decoder"])
    y = bilinear_align_corners(y, x.shape[1], x.shape[2])
    return jnp.transpose(y, (0, 3, 1, 2))


# ----------------------------------------------------------------------------
if __name__ == "__main__":
    root = jax.random.PRNGKey(0)
    pkey, xkey = jax.random.split(root)
    params = init_deeplab(pkey, num_classes=1)
    # Small input consistent with the module (NCHW, 3 channels, /16-divisible).
    x = jax.random.normal(xkey, (1, 3, 64, 64), jnp.float32)
    out = deeplab_forward(params, x)
    out = jax.block_until_ready(out)
    assert out.shape == (1, 1, 64, 64), out.shape
    assert bool(jnp.all(jnp.isfinite(out)))
    print("KERNEL_OK")
</pallas_src>

<mosaic_0001>
module attributes {stable_mosaic.version = 11 : i64} {
  func.func @_matmul_kernel(%arg0: i32, %arg1: i32, %arg2: i32, %arg3: memref<512x128xbf16, #tpu.memory_space<vmem>>, %arg4: memref<128x128xbf16, #tpu.memory_space<vmem>>, %arg5: memref<512x128xf32, #tpu.memory_space<vmem>>, %arg6: memref<1x1x128xf32, #tpu.memory_space<vmem>>) attributes {dimension_semantics = [#tpu.dimension_semantics<parallel>, #tpu.dimension_semantics<parallel>, #tpu.dimension_semantics<arbitrary>], iteration_bounds = array<i64: 2, 1, 1>, scalar_prefetch = 0 : i64, scratch_operands = 0 : i64, tpu.core_type = #tpu.core_type<tc>, window_params = [{transform_indices = @transform_0, window_bounds = array<i64: 512, 128>}, {transform_indices = @transform_1, window_bounds = array<i64: 128, 128>}, {transform_indices = @transform_2, window_bounds = array<i64: 512, 128>}, {transform_indices = @transform_3, window_bounds = array<i64: 1, 1, 128>}]} {
    %c0_i32 = arith.constant 0 : i32
    %0 = arith.cmpi eq, %arg2, %c0_i32 : i32
    %1 = arith.extui %0 : i1 to i32
    %c0_i32_0 = arith.constant 0 : i32
    %2 = arith.cmpi ne, %1, %c0_i32_0 : i32
    scf.if %2 {
      %cst_10 = arith.constant 0.000000e+00 : f32
      %12 = vector.broadcast %cst_10 : f32 to vector<512x128xf32>
      %c0_11 = arith.constant 0 : index
      %c0_12 = arith.constant 0 : index
      %13 = vector.load %arg5[%c0_11, %c0_12] : memref<512x128xf32, #tpu.memory_space<vmem>>, vector<512x128xf32>
      tpu.vector_store %arg5[%c0_11, %c0_12], %12 {strides = array<i32>} : memref<512x128xf32, #tpu.memory_space<vmem>>, vector<512x128xf32>,
    } else {
    }
    %c0 = arith.constant 0 : index
    %c0_1 = arith.constant 0 : index
    %3 = vector.load %arg3[%c0, %c0_1] : memref<512x128xbf16, #tpu.memory_space<vmem>>, vector<512x128xbf16>
    %c0_2 = arith.constant 0 : index
    %c0_3 = arith.constant 0 : index
    %4 = vector.load %arg5[%c0_2, %c0_3] : memref<512x128xf32, #tpu.memory_space<vmem>>, vector<512x128xf32>
    %c0_4 = arith.constant 0 : index
    %c0_5 = arith.constant 0 : index
    %5 = vector.load %arg4[%c0_4, %c0_5] : memref<128x128xbf16, #tpu.memory_space<vmem>>, vector<128x128xbf16>
    %cst = arith.constant dense<0.000000e+00> : vector<512x128xf32>
    %6 = tpu.matmul %3, %5, %cst {dimension_numbers = #tpu.dot_dimension_numbers<[1], [0], [0], [1], [0, 0, 1, 1], [], []>} : vector<512x128xbf16>, vector<128x128xbf16>, vector<512x128xf32> -> vector<512x128xf32>
    %7 = arith.addf %4, %6 : vector<512x128xf32>
    %c0_6 = arith.constant 0 : index
    %c0_7 = arith.constant 0 : index
    %8 = vector.load %arg5[%c0_6, %c0_7] : memref<512x128xf32, #tpu.memory_space<vmem>>, vector<512x128xf32>
    tpu.vector_store %arg5[%c0_6, %c0_7], %7 {strides = array<i32>} : memref<512x128xf32, #tpu.memory_space<vmem>>, vector<512x128xf32>,
    %c0_i32_8 = arith.constant 0 : i32
    %9 = arith.cmpi eq, %arg2, %c0_i32_8 : i32
    %10 = arith.extui %9 : i1 to i32
    %c0_i32_9 = arith.constant 0 : i32
    %11 = arith.cmpi ne, %10, %c0_i32_9 : i32
    scf.if %11 {
      %c0_10 = arith.constant 0 : index
      %c0_11 = arith.constant 0 : index
      %12 = vector.load %arg5[%c0_10, %c0_11] : memref<512x128xf32, #tpu.memory_space<vmem>>, vector<512x128xf32>
      %13 = arith.mulf %12, %12 : vector<512x128xf32>
      %cst_12 = arith.constant dense<0.000000e+00> : vector<128xf32>
      %14 = vector.multi_reduction <add>, %13, %cst_12 [0] : vector<512x128xf32> to vector<128xf32>
      %15 = vector.shape_cast %14 : vector<128xf32> to vector<1x128xf32>
      %16 = vector.shape_cast %15 : vector<1x128xf32> to vector<1x1x128xf32>
      %c0_13 = arith.constant 0 : index
      %c0_14 = arith.constant 0 : index
      %c0_15 = arith.constant 0 : index
      %17 = vector.load %arg6[%c0_13, %c0_14, %c0_15] : memref<1x1x128xf32, #tpu.memory_space<vmem>>, vector<1x1x128xf32>
      tpu.vector_store %arg6[%c0_13, %c0_14, %c0_15], %16 {strides = array<i32>} : memref<1x1x128xf32, #tpu.memory_space<vmem>>, vector<1x1x128xf32>,
    } else {
    }
    return
  }
  func.func @transform_0(%arg0: i32, %arg1: i32, %arg2: i32) -> (i32, i32) {
    %c0_i32 = arith.constant 0 : i32
    return %arg0, %arg2 : i32, i32
  }
  func.func @transform_1(%arg0: i32, %arg1: i32, %arg2: i32) -> (i32, i32) {
    %c0_i32 = arith.constant 0 : i32
    return %arg2, %arg1 : i32, i32
  }
  func.func @transform_2(%arg0: i32, %arg1: i32, %arg2: i32) -> (i32, i32) {
    %c0_i32 = arith.constant 0 : i32
    return %arg0, %arg1 : i32, i32
  }
  func.func @transform_3(%arg0: i32, %arg1: i32, %arg2: i32) -> (i32, i32, i32) {
    %c0_i32 = arith.constant 0 : i32
    %c0_i32_0 = arith.constant 0 : i32
    return %arg0, %c0_i32, %arg1 : i32, i32, i32
  }
}

</mosaic_0001>

<llo_original>
// kernel: matmul_pallas.1
$region0: #{matmul_pallas.1}
  #allocation0 [shape = 'u32[]', space=smem, size = 0x4, offset = 0x4, fixed_abs, tag = 'smem constant byte address 0x4 - core index']
  #allocation1 [shape = 'u32[144,128]{1,0:T(1,128)}', space=vmem, size = 0x12000, scoped, tag = 'internal scratch']
  %s0 = inlined_call_operand.hbm [shape: bf16[1024,128], index: 0, kind: input, shape index: {}]
  %s1 = inlined_call_operand.hbm [shape: bf16[128,128], index: 1, kind: input, shape index: {}]
  %s2 = inlined_call_operand.hbm [shape: f32[1024,128], index: 2, kind: output, shape index: {0}]
  %s3 = inlined_call_operand.hbm [shape: f32[2,1,128], index: 3, kind: output, shape index: {1}]
  %4 = xla_tuple %s2, %s3
  %s5 = sld [smem:[#allocation0]]
  $region65: #{matmul_pallas.1} parent=0
    _
  %s7 = ssub.s32 1, %s5
  %s8 = scalar_select 0, %s7, %s5
  $region1: #{matmul_pallas.1} parent=0
    #allocation2 [shape = 'u8[262144]{0}', space=vmem, size = 0x40000, scoped, tag = 'input window, operand 0']
    #allocation3 [shape = 's32[2]{0}', space=sflag, size = 0x8, scoped, tag = 'scoped memory for matmul_pallas.1']
    #allocation4 [shape = 's32[2]{0}', space=sflag, size = 0x8, scoped, tag = 'scoped memory for matmul_pallas.1']
    #allocation5 [shape = 'u8[32768]{0}', space=vmem, size = 0x8000, scoped, tag = 'input window, operand 1, single buffered']
    #allocation6 [shape = 's32[1]{0}', space=sflag, size = 0x4, scoped, tag = 'scoped memory for matmul_pallas.1']
    #allocation7 [shape = 'u8[524288]{0}', space=vmem, size = 0x80000, scoped, tag = 'output window, operand 0']
    #allocation8 [shape = 'u8[1024]{0}', space=vmem, size = 0x400, scoped, tag = 'output window, operand 1']
    #allocation9 [shape = 's32[2]{0}', space=sflag, size = 0x8, scoped, tag = 'scoped memory for matmul_pallas.1']
    %9 = vsyncpa [#allocation3], 0
    %s10 = scalar_lea.sflag [#allocation3], 1
    %11 = vsyncpa %s10, 0
    %12 = vsyncpa [#allocation6], 0
    %13 = vsyncpa [#allocation4], 0
    %s14 = scalar_lea.sflag [#allocation4], 1
    %15 = vsyncpa %s14, 0
    %16 = vsyncpa [#allocation9], 0
    %s17 = scalar_lea.sflag [#allocation9], 1
    %18 = vsyncpa %s17, 0
    loop: start=0, step=1, limit=4
    $region2: #{matmul_pallas.1} parent=1 // loop_pre_header
      _
    $region3: #{matmul_pallas.1} parent=1 // loop_header
      %s20 = sphi 0, %s24
      %p21 = scmp.ge.s32.totalorder %s20, 4
      %s27 = sphi 0, %s46
      %s28 = sphi 0, %s42
      %s29 = sphi 0, %s38
      %s30 = sphi 0, %s27
      %s31 = sphi 0, %s28
      %s32 = sphi 0, %s29
      %s33 = sphi 0, %s30
      %s34 = sphi 0, %s31
      %s35 = sphi 0, %s32
      %s51 = sphi 0, %s53
      %s54 = sphi 0, %s51
      %s55 = sphi 0, %s54
      %s71 = sphi 0, %s55
      %s79 = sphi 0, %s81
      %s82 = sphi 0, %s79
      %s83 = sphi 0, %s82
      %s99 = sphi 0, %s83
      %s107 = sphi 0, %s109
      %s110 = sphi 0, %s107
      %s111 = sphi 0, %s110
      %s127 = sphi 0, %s111
      %s135 = sphi 0, %s137
      %s138 = sphi 0, %s135
      %s139 = sphi 0, %s138
      %s155 = sphi 0, %s139
    $region4: #{matmul_pallas.1} parent=1 // loop_header_branch
      %23 = sbr.rel (%p21) target = $region8
    $region5: #{matmul_pallas.1} parent=1 // loop_body
      %s25 = ssub.s32 %s20, 1
      %s26 = ssub.s32 %s20, 2
      %s36 = sadd.s32 1, %s29
      %p37 = scmp.ge.s32.totalorder %s36, 1
      %s38 = scalar_select %p37, 0, %s36
      %s39 = sadd.s32 1, %s28
      %s40 = scalar_select %p37, %s39, %s28
      %p41 = scmp.ge.s32.totalorder %s40, 1
      %s42 = scalar_select %p41, 0, %s40
      %s43 = sadd.s32 1, %s27
      %s44 = scalar_select %p41, %s43, %s27
      %p45 = scmp.ge.s32.totalorder %s44, 2
      %s46 = scalar_select %p45, 0, %s44
      %s47 = ssub.s32 %s27, %s46
      %s48 = ssub.s32 %s29, %s38
      %s49 = sor.u32 %s47, %s48
      %p50 = scmp.eq.s32.totalorder %s49, 0
      %s52 = sadd.s32 %s51, 1
      %s53 = scalar_select %p50, %s51, %s52
      %p56 = pneg %p50
      %p57 = scmp.eq.s32.totalorder %s20, 1
      %p58 = por %p56, %p57
      %p59 = scmp.ne.s32.totalorder %s51, %s54
      %p60 = scmp.eq.s32.totalorder %s20, 0
      %p61 = por %p59, %p60
      %p62 = scmp.ne.s32.totalorder %s51, %s54
      %p63 = scmp.eq.s32.totalorder %s25, 1
      %p64 = por %p62, %p63
      %p65 = scmp.ne.s32.totalorder %s54, %s55
      %p66 = scmp.eq.s32.totalorder %s25, 0
      %p67 = por %p65, %p66
      %p68 = scmp.ne.s32.totalorder %s54, %s55
      %p69 = scmp.eq.s32.totalorder %s26, 1
      %p70 = por %p68, %p69
      %p72 = scmp.ne.s32.totalorder %s55, %s71
      %p73 = scmp.eq.s32.totalorder %s26, 0
      %p74 = por %p72, %p73
      %s75 = ssub.s32 %s29, %s38
      %s76 = ssub.s32 %s28, %s42
      %s77 = sor.u32 %s75, %s76
      %p78 = scmp.eq.s32.totalorder %s77, 0
      %s80 = sadd.s32 %s79, 1
      %s81 = scalar_select %p78, %s79, %s80
      %p84 = pneg %p78
      %p85 = scmp.eq.s32.totalorder %s20, 1
      %p86 = por %p84, %p85
      %p87 = scmp.ne.s32.totalorder %s79, %s82
      %p88 = scmp.eq.s32.totalorder %s20, 0
      %p89 = por %p87, %p88
      %p90 = scmp.ne.s32.totalorder %s79, %s82
      %p91 = scmp.eq.s32.totalorder %s25, 1
      %p92 = por %p90, %p91
      %p93 = scmp.ne.s32.totalorder %s82, %s83
      %p94 = scmp.eq.s32.totalorder %s25, 0
      %p95 = por %p93, %p94
      %p96 = scmp.ne.s32.totalorder %s82, %s83
      %p97 = scmp.eq.s32.totalorder %s26, 1
      %p98 = por %p96, %p97
      %p100 = scmp.ne.s32.totalorder %s83, %s99
      %p101 = scmp.eq.s32.totalorder %s26, 0
      %p102 = por %p100, %p101
      %s103 = ssub.s32 %s27, %s46
      %s104 = ssub.s32 %s28, %s42
      %s105 = sor.u32 %s103, %s104
      %p106 = scmp.eq.s32.totalorder %s105, 0
      %s108 = sadd.s32 %s107, 1
      %s109 = scalar_select %p106, %s107, %s108
      %p112 = pneg %p106
      %p113 = scmp.eq.s32.totalorder %s20, 1
      %p114 = por %p112, %p113
      %p115 = scmp.ne.s32.totalorder %s107, %s110
      %p116 = scmp.eq.s32.totalorder %s20, 0
      %p117 = por %p115, %p116
      %p118 = scmp.ne.s32.totalorder %s107, %s110
      %p119 = scmp.eq.s32.totalorder %s25, 1
      %p120 = por %p118, %p119
      %p121 = scmp.ne.s32.totalorder %s110, %s111
      %p122 = scmp.eq.s32.totalorder %s25, 0
      %p123 = por %p121, %p122
      %p124 = scmp.ne.s32.totalorder %s110, %s111
      %p125 = scmp.eq.s32.totalorder %s26, 1
      %p126 = por %p124, %p125
      %p128 = scmp.ne.s32.totalorder %s111, %s127
      %p129 = scmp.eq.s32.totalorder %s26, 0
      %p130 = por %p128, %p129
      %s131 = ssub.s32 %s27, %s46
      %s132 = ssub.s32 %s28, %s42
      %s133 = sor.u32 %s131, %s132
      %p134 = scmp.eq.s32.totalorder %s133, 0
      %s136 = sadd.s32 %s135, 1
      %s137 = scalar_select %p134, %s135, %s136
      %p140 = pneg %p134
      %p141 = scmp.eq.s32.totalorder %s20, 1
      %p142 = por %p140, %p141
      %p143 = scmp.ne.s32.totalorder %s135, %s138
      %p144 = scmp.eq.s32.totalorder %s20, 0
      %p145 = por %p143, %p144
      %p146 = scmp.ne.s32.totalorder %s135, %s138
      %p147 = scmp.eq.s32.totalorder %s25, 1
      %p148 = por %p146, %p147
      %p149 = scmp.ne.s32.totalorder %s138, %s139
      %p150 = scmp.eq.s32.totalorder %s25, 0
      %p151 = por %p149, %p150
      %p152 = scmp.ne.s32.totalorder %s138, %s139
      %p153 = scmp.eq.s32.totalorder %s26, 1
      %p154 = por %p152, %p153
      %p156 = scmp.ne.s32.totalorder %s139, %s155
      %p157 = scmp.eq.s32.totalorder %s26, 0
      %p158 = por %p156, %p157
      %p159 = scmp.le.s32.totalorder 1, %s20
      %p160 = scmp.lt.s32.totalorder %s20, 3
      %p161 = pnand %p159, %p160
      %p162 = pneg %p161
      // Predicated region
      $region9: #{matmul_pallas.1} parent=5 // pred_check
        _
      $region10: #{matmul_pallas.1} parent=5 // pred_check_branch
        %164 = sbr.rel (%p161) target = $region12
      $region11: #{matmul_pallas.1} parent=5 // pred_region
        %s165 = ssub.s32 %s20, 1
        // Predicated region
        $region13: #{matmul_pallas.1} parent=11 // pred_check
          %p166 = pneg %p95
        $region14: #{matmul_pallas.1} parent=11 // pred_check_branch
          %168 = sbr.rel (%p166) target = $region16
        $region15: #{matmul_pallas.1} parent=11 // pred_region
          %s169 = smul.u32 16, %s32
          %s171 = ssub.s32 1024, 1024
          %172 = vsyncadd [#allocation6], %s171
          %s173 = sadd.s32 %s31, %s169
          %s174 = smul.addr %s173, 64
          %s175 = scalar_lea.hbm %s1, %s174
          %s176 = sshll.u32 [#allocation5], 4
          %s177 = int_to_ptr.vmem [resolvable:$true] %s176
          %182 = dma.hbm_to_vmem [thread:$0]  %s175, 1024, %s177, [#allocation6], 64, 64, 4
        $region16: #{matmul_pallas.1} parent=11 // pred_fallthru
          _
      $region12: #{matmul_pallas.1} parent=5 // pred_fallthru
        _
      %p183 = scmp.lt.s32.totalorder %s20, 2
      // Predicated region
      $region17: #{matmul_pallas.1} parent=5 // pred_check
        %p184 = pneg %p183
      $region18: #{matmul_pallas.1} parent=5 // pred_check_branch
        %186 = sbr.rel (%p184) target = $region20
      $region19: #{matmul_pallas.1} parent=5 // pred_region
        // Predicated region
        $region21: #{matmul_pallas.1} parent=19 // pred_check
          %p187 = pneg %p61
        $region22: #{matmul_pallas.1} parent=19 // pred_check_branch
          %189 = sbr.rel (%p187) target = $region24
        $region23: #{matmul_pallas.1} parent=19 // pred_region
          %s190 = sand.u32 %s51, 1
          %s191 = scalar_lea.sflag [#allocation3], %s190
          %s192 = sand.u32 %s51, 1
          %s193 = smul.addr %s192, 256
          %s194 = scalar_lea.vmem [#allocation2], %s193
          %s195 = smul.u32 64, %s27
          %s197 = ssub.s32 4096, 4096
          %198 = vsyncadd %s191, %s197
          %s199 = sadd.s32 %s29, %s195
          %s200 = smul.addr %s199, 64
          %s201 = scalar_lea.hbm %s0, %s200
          %s202 = sshll.u32 %s194, 4
          %s203 = int_to_ptr.vmem [resolvable:$true] %s202
          %208 = dma.hbm_to_vmem [thread:$0]  %s201, 4096, %s203, %s191, 64, 64, 4
        $region24: #{matmul_pallas.1} parent=19 // pred_fallthru
          _
      $region20: #{matmul_pallas.1} parent=5 // pred_fallthru
        _
      %p209 = scmp.le.s32.totalorder 1, %s20
      %p210 = scmp.lt.s32.totalorder %s20, 3
      %p211 = pnand %p209, %p210
      %p212 = pneg %p211
      // Predicated region
      $region25: #{matmul_pallas.1} parent=5 // pred_check
        _
      $region26: #{matmul_pallas.1} parent=5 // pred_check_branch
        %214 = sbr.rel (%p211) target = $region28
      $region27: #{matmul_pallas.1} parent=5 // pred_region
        %s215 = ssub.s32 %s20, 1
        %s216 = sand.u32 %s54, 1
        %s217 = scalar_lea.sflag [#allocation3], %s216
        %s218 = sand.u32 %s54, 1
        %s219 = smul.addr %s218, 256
        %s220 = scalar_lea.vmem [#allocation2], %s219
        // Predicated region
        $region29: #{matmul_pallas.1} parent=27 // pred_check
          %p221 = pneg %p67
        $region30: #{matmul_pallas.1} parent=27 // pred_check_branch
          %223 = sbr.rel (%p221) target = $region32
        $region31: #{matmul_pallas.1} parent=27 // pred_region
          %224 = dma.done %s217, 4096
        $region32: #{matmul_pallas.1} parent=27 // pred_fallthru
          _
        // Predicated region
        $region33: #{matmul_pallas.1} parent=27 // pred_check
          %p225 = pneg %p95
        $region34: #{matmul_pallas.1} parent=27 // pred_check_branch
          %227 = sbr.rel (%p225) target = $region36
        $region35: #{matmul_pallas.1} parent=27 // pred_region
          %228 = dma.done [#allocation6], 1024
        $region36: #{matmul_pallas.1} parent=27 // pred_fallthru
          _
        %s229 = sand.u32 %s54, 1
        %s230 = scalar_lea.sflag [#allocation3], %s229
        %s231 = sand.u32 %s54, 1
        %s232 = smul.addr %s231, 256
        %s233 = scalar_lea.vmem [#allocation2], %s232
        %p234 = pneg %p67
        %p235 = pneg %p64
        %p236 = pneg %p95
        %p237 = pneg %p92
        %p238 = pneg %p123
        %p239 = pneg %p120
        %s240 = sand.u32 %s110, 1
        %s241 = scalar_lea.sflag [#allocation4], %s240
        %s242 = sand.u32 %s110, 1
        %s243 = smul.addr %s242, 512
        %s244 = scalar_lea.vmem [#allocation7], %s243
        %p245 = pneg %p151
        %p246 = pneg %p148
        %s247 = sand.u32 %s138, 1
        %s248 = scalar_lea.sflag [#allocation9], %s247
        %s249 = sand.u32 %s138, 1
        %s250 = scalar_lea.vmem [#allocation8], %s249
        %s251 = smul.u32 64, %s30
        %s252 = smul.u32 16, %s32
        %s253 = smul.u32 64, %s30
        %p255 = scmp.eq.s32.totalorder %s32, 0
        // Predicated region
        $region37: #{matmul_pallas.1} parent=27 // pred_check
          %p256 = pneg %p255
        $region38: #{matmul_pallas.1} parent=27 // pred_check_branch
          %258 = sbr.rel (%p256) target = $region40
        $region39: #{matmul_pallas.1} parent=27 // pred_region
          %259 = vst [vmem:[%s244] sm:$0xff] 0.0
          %260 = vst [vmem:[%s244 + $0x8] sm:$0xff] 0.0
          %261 = vst [vmem:[%s244 + $0x10] sm:$0xff] 0.0
          %262 = vst [vmem:[%s244 + $0x18] sm:$0xff] 0.0
          %263 = vst [vmem:[%s244 + $0x20] sm:$0xff] 0.0
          %264 = vst [vmem:[%s244 + $0x28] sm:$0xff] 0.0
          %265 = vst [vmem:[%s244 + $0x30] sm:$0xff] 0.0
          %266 = vst [vmem:[%s244 + $0x38] sm:$0xff] 0.0
          %267 = vst [vmem:[%s244 + $0x40] sm:$0xff] 0.0
          %268 = vst [vmem:[%s244 + $0x48] sm:$0xff] 0.0
          %269 = vst [vmem:[%s244 + $0x50] sm:$0xff] 0.0
          %270 = vst [vmem:[%s244 + $0x58] sm:$0xff] 0.0
          %271 = vst [vmem:[%s244 + $0x60] sm:$0xff] 0.0
          %272 = vst [vmem:[%s244 + $0x68] sm:$0xff] 0.0
          %273 = vst [vmem:[%s244 + $0x70] sm:$0xff] 0.0
          %274 = vst [vmem:[%s244 + $0x78] sm:$0xff] 0.0
          %275 = vst [vmem:[%s244 + $0x80] sm:$0xff] 0.0
          %276 = vst [vmem:[%s244 + $0x88] sm:$0xff] 0.0
          %277 = vst [vmem:[%s244 + $0x90] sm:$0xff] 0.0
          %278 = vst [vmem:[%s244 + $0x98] sm:$0xff] 0.0
          %279 = vst [vmem:[%s244 + $0xa0] sm:$0xff] 0.0
          %280 = vst [vmem:[%s244 + $0xa8] sm:$0xff] 0.0
          %281 = vst [vmem:[%s244 + $0xb0] sm:$0xff] 0.0
          %282 = vst [vmem:[%s244 + $0xb8] sm:$0xff] 0.0
          %283 = vst [vmem:[%s244 + $0xc0] sm:$0xff] 0.0
          %284 = vst [vmem:[%s244 + $0xc8] sm:$0xff] 0.0
          %285 = vst [vmem:[%s244 + $0xd0] sm:$0xff] 0.0
          %286 = vst [vmem:[%s244 + $0xd8] sm:$0xff] 0.0
          %287 = vst [vmem:[%s244 + $0xe0] sm:$0xff] 0.0
          %288 = vst [vmem:[%s244 + $0xe8] sm:$0xff] 0.0
          %289 = vst [vmem:[%s244 + $0xf0] sm:$0xff] 0.0
          %290 = vst [vmem:[%s244 + $0xf8] sm:$0xff] 0.0
          %291 = vst [vmem:[%s244 + $0x100] sm:$0xff] 0.0
          %292 = vst [vmem:[%s244 + $0x108] sm:$0xff] 0.0
          %293 = vst [vmem:[%s244 + $0x110] sm:$0xff] 0.0
          %294 = vst [vmem:[%s244 + $0x118] sm:$0xff] 0.0
          %295 = vst [vmem:[%s244 + $0x120] sm:$0xff] 0.0
          %296 = vst [vmem:[%s244 + $0x128] sm:$0xff] 0.0
          %297 = vst [vmem:[%s244 + $0x130] sm:$0xff] 0.0
          %298 = vst [vmem:[%s244 + $0x138] sm:$0xff] 0.0
          %299 = vst [vmem:[%s244 + $0x140] sm:$0xff] 0.0
          %300 = vst [vmem:[%s244 + $0x148] sm:$0xff] 0.0
          %301 = vst [vmem:[%s244 + $0x150] sm:$0xff] 0.0
          %302 = vst [vmem:[%s244 + $0x158] sm:$0xff] 0.0
          %303 = vst [vmem:[%s244 + $0x160] sm:$0xff] 0.0
          %304 = vst [vmem:[%s244 + $0x168] sm:$0xff] 0.0
          %305 = vst [vmem:[%s244 + $0x170] sm:$0xff] 0.0
          %306 = vst [vmem:[%s244 + $0x178] sm:$0xff] 0.0
          %307 = vst [vmem:[%s244 + $0x180] sm:$0xff] 0.0
          %308 = vst [vmem:[%s244 + $0x188] sm:$0xff] 0.0
          %309 = vst [vmem:[%s244 + $0x190] sm:$0xff] 0.0
          %310 = vst [vmem:[%s244 + $0x198] sm:$0xff] 0.0
          %311 = vst [vmem:[%s244 + $0x1a0] sm:$0xff] 0.0
          %312 = vst [vmem:[%s244 + $0x1a8] sm:$0xff] 0.0
          %313 = vst [vmem:[%s244 + $0x1b0] sm:$0xff] 0.0
          %314 = vst [vmem:[%s244 + $0x1b8] sm:$0xff] 0.0
          %315 = vst [vmem:[%s244 + $0x1c0] sm:$0xff] 0.0
          %316 = vst [vmem:[%s244 + $0x1c8] sm:$0xff] 0.0
          %317 = vst [vmem:[%s244 + $0x1d0] sm:$0xff] 0.0
          %318 = vst [vmem:[%s244 + $0x1d8] sm:$0xff] 0.0
          %319 = vst [vmem:[%s244 + $0x1e0] sm:$0xff] 0.0
          %320 = vst [vmem:[%s244 + $0x1e8] sm:$0xff] 0.0
          %321 = vst [vmem:[%s244 + $0x1f0] sm:$0xff] 0.0
          %322 = vst [vmem:[%s244 + $0x1f8] sm:$0xff] 0.0
        $region40: #{matmul_pallas.1} parent=27 // pred_fallthru
          _
        %v323 = vld [vmem:[%s220] sm:$0xf]
        %v324 = vld [vmem:[%s220 + $0x4] sm:$0xf]
        %v325 = vld [vmem:[%s220 + $0x8] sm:$0xf]
        %v326 = vld [vmem:[%s220 + $0xc] sm:$0xf]
        %v327 = vld [vmem:[%s220 + $0x10] sm:$0xf]
        %v328 = vld [vmem:[%s220 + $0x14] sm:$0xf]
        %v329 = vld [vmem:[%s220 + $0x18] sm:$0xf]
        %v330 = vld [vmem:[%s220 + $0x1c] sm:$0xf]
        %v331 = vld [vmem:[%s220 + $0x20] sm:$0xf]
        %v332 = vld [vmem:[%s220 + $0x24] sm:$0xf]
        %v333 = vld [vmem:[%s220 + $0x28] sm:$0xf]
        %v334 = vld [vmem:[%s220 + $0x2c] sm:$0xf]
        %v335 = vld [vmem:[%s220 + $0x30] sm:$0xf]
        %v336 = vld [vmem:[%s220 + $0x34] sm:$0xf]
        %v337 = vld [vmem:[%s220 + $0x38] sm:$0xf]
        %v338 = vld [vmem:[%s220 + $0x3c] sm:$0xf]
        %v339 = vld [vmem:[%s220 + $0x40] sm:$0xf]
        %v340 = vld [vmem:[%s220 + $0x44] sm:$0xf]
        %v341 = vld [vmem:[%s220 + $0x48] sm:$0xf]
        %v342 = vld [vmem:[%s220 + $0x4c] sm:$0xf]
        %v343 = vld [vmem:[%s220 + $0x50] sm:$0xf]
        %v344 = vld [vmem:[%s220 + $0x54] sm:$0xf]
        %v345 = vld [vmem:[%s220 + $0x58] sm:$0xf]
        %v346 = vld [vmem:[%s220 + $0x5c] sm:$0xf]
        %v347 = vld [vmem:[%s220 + $0x60] sm:$0xf]
        %v348 = vld [vmem:[%s220 + $0x64] sm:$0xf]
        %v349 = vld [vmem:[%s220 + $0x68] sm:$0xf]
        %v350 = vld [vmem:[%s220 + $0x6c] sm:$0xf]
        %v351 = vld [vmem:[%s220 + $0x70] sm:$0xf]
        %v352 = vld [vmem:[%s220 + $0x74] sm:$0xf]
        %v353 = vld [vmem:[%s220 + $0x78] sm:$0xf]
        %v354 = vld [vmem:[%s220 + $0x7c] sm:$0xf]
        %v355 = vld [vmem:[%s220 + $0x80] sm:$0xf]
        %v356 = vld [vmem:[%s220 + $0x84] sm:$0xf]
        %v357 = vld [vmem:[%s220 + $0x88] sm:$0xf]
        %v358 = vld [vmem:[%s220 + $0x8c] sm:$0xf]
        %v359 = vld [vmem:[%s220 + $0x90] sm:$0xf]
        %v360 = vld [vmem:[%s220 + $0x94] sm:$0xf]
        %v361 = vld [vmem:[%s220 + $0x98] sm:$0xf]
        %v362 = vld [vmem:[%s220 + $0x9c] sm:$0xf]
        %v363 = vld [vmem:[%s220 + $0xa0] sm:$0xf]
        %v364 = vld [vmem:[%s220 + $0xa4] sm:$0xf]
        %v365 = vld [vmem:[%s220 + $0xa8] sm:$0xf]
        %v366 = vld [vmem:[%s220 + $0xac] sm:$0xf]
        %v367 = vld [vmem:[%s220 + $0xb0] sm:$0xf]
        %v368 = vld [vmem:[%s220 + $0xb4] sm:$0xf]
        %v369 = vld [vmem:[%s220 + $0xb8] sm:$0xf]
        %v370 = vld [vmem:[%s220 + $0xbc] sm:$0xf]
        %v371 = vld [vmem:[%s220 + $0xc0] sm:$0xf]
        %v372 = vld [vmem:[%s220 + $0xc4] sm:$0xf]
        %v373 = vld [vmem:[%s220 + $0xc8] sm:$0xf]
        %v374 = vld [vmem:[%s220 + $0xcc] sm:$0xf]
        %v375 = vld [vmem:[%s220 + $0xd0] sm:$0xf]
        %v376 = vld [vmem:[%s220 + $0xd4] sm:$0xf]
        %v377 = vld [vmem:[%s220 + $0xd8] sm:$0xf]
        %v378 = vld [vmem:[%s220 + $0xdc] sm:$0xf]
        %v379 = vld [vmem:[%s220 + $0xe0] sm:$0xf]
        %v380 = vld [vmem:[%s220 + $0xe4] sm:$0xf]
        %v381 = vld [vmem:[%s220 + $0xe8] sm:$0xf]
        %v382 = vld [vmem:[%s220 + $0xec] sm:$0xf]
        %v383 = vld [vmem:[%s220 + $0xf0] sm:$0xf]
        %v384 = vld [vmem:[%s220 + $0xf4] sm:$0xf]
        %v385 = vld [vmem:[%s220 + $0xf8] sm:$0xf]
        %v386 = vld [vmem:[%s220 + $0xfc] sm:$0xf]
        %v387 = vld [vmem:[%s244] sm:$0xff]
        %v388 = vld [vmem:[%s244 + $0x8] sm:$0xff]
        %v389 = vld [vmem:[%s244 + $0x10] sm:$0xff]
        %v390 = vld [vmem:[%s244 + $0x18] sm:$0xff]
        %v391 = vld [vmem:[%s244 + $0x20] sm:$0xff]
        %v392 = vld [vmem:[%s244 + $0x28] sm:$0xff]
        %v393 = vld [vmem:[%s244 + $0x30] sm:$0xff]
        %v394 = vld [vmem:[%s244 + $0x38] sm:$0xff]
        %v395 = vld [vmem:[%s244 + $0x40] sm:$0xff]
        %v396 = vld [vmem:[%s244 + $0x48] sm:$0xff]
        %v397 = vld [vmem:[%s244 + $0x50] sm:$0xff]
        %v398 = vld [vmem:[%s244 + $0x58] sm:$0xff]
        %v399 = vld [vmem:[%s244 + $0x60] sm:$0xff]
        %v400 = vld [vmem:[%s244 + $0x68] sm:$0xff]
        %v401 = vld [vmem:[%s244 + $0x70] sm:$0xff]
        %v402 = vld [vmem:[%s244 + $0x78] sm:$0xff]
        %v403 = vld [vmem:[%s244 + $0x80] sm:$0xff]
        %v404 = vld [vmem:[%s244 + $0x88] sm:$0xff]
        %v405 = vld [vmem:[%s244 + $0x90] sm:$0xff]
        %v406 = vld [vmem:[%s244 + $0x98] sm:$0xff]
        %v407 = vld [vmem:[%s244 + $0xa0] sm:$0xff]
        %v408 = vld [vmem:[%s244 + $0xa8] sm:$0xff]
        %v409 = vld [vmem:[%s244 + $0xb0] sm:$0xff]
        %v410 = vld [vmem:[%s244 + $0xb8] sm:$0xff]
        %v411 = vld [vmem:[%s244 + $0xc0] sm:$0xff]
        %v412 = vld [vmem:[%s244 + $0xc8] sm:$0xff]
        %v413 = vld [vmem:[%s244 + $0xd0] sm:$0xff]
        %v414 = vld [vmem:[%s244 + $0xd8] sm:$0xff]
        %v415 = vld [vmem:[%s244 + $0xe0] sm:$0xff]
        %v416 = vld [vmem:[%s244 + $0xe8] sm:$0xff]
        %v417 = vld [vmem:[%s244 + $0xf0] sm:$0xff]
        %v418 = vld [vmem:[%s244 + $0xf8] sm:$0xff]
        %v419 = vld [vmem:[%s244 + $0x100] sm:$0xff]
        %v420 = vld [vmem:[%s244 + $0x108] sm:$0xff]
        %v421 = vld [vmem:[%s244 + $0x110] sm:$0xff]
        %v422 = vld [vmem:[%s244 + $0x118] sm:$0xff]
        %v423 = vld [vmem:[%s244 + $0x120] sm:$0xff]
        %v424 = vld [vmem:[%s244 + $0x128] sm:$0xff]
        %v425 = vld [vmem:[%s244 + $0x130] sm:$0xff]
        %v426 = vld [vmem:[%s244 + $0x138] sm:$0xff]
        %v427 = vld [vmem:[%s244 + $0x140] sm:$0xff]
        %v428 = vld [vmem:[%s244 + $0x148] sm:$0xff]
        %v429 = vld [vmem:[%s244 + $0x150] sm:$0xff]
        %v430 = vld [vmem:[%s244 + $0x158] sm:$0xff]
        %v431 = vld [vmem:[%s244 + $0x160] sm:$0xff]
        %v432 = vld [vmem:[%s244 + $0x168] sm:$0xff]
        %v433 = vld [vmem:[%s244 + $0x170] sm:$0xff]
        %v434 = vld [vmem:[%s244 + $0x178] sm:$0xff]
        %v435 = vld [vmem:[%s244 + $0x180] sm:$0xff]
        %v436 = vld [vmem:[%s244 + $0x188] sm:$0xff]
        %v437 = vld [vmem:[%s244 + $0x190] sm:$0xff]
        %v438 = vld [vmem:[%s244 + $0x198] sm:$0xff]
        %v439 = vld [vmem:[%s244 + $0x1a0] sm:$0xff]
        %v440 = vld [vmem:[%s244 + $0x1a8] sm:$0xff]
        %v441 = vld [vmem:[%s244 + $0x1b0] sm:$0xff]
        %v442 = vld [vmem:[%s244 + $0x1b8] sm:$0xff]
        %v443 = vld [vmem:[%s244 + $0x1c0] sm:$0xff]
        %v444 = vld [vmem:[%s244 + $0x1c8] sm:$0xff]
        %v445 = vld [vmem:[%s244 + $0x1d0] sm:$0xff]
        %v446 = vld [vmem:[%s244 + $0x1d8] sm:$0xff]
        %v447 = vld [vmem:[%s244 + $0x1e0] sm:$0xff]
        %v448 = vld [vmem:[%s244 + $0x1e8] sm:$0xff]
        %v449 = vld [vmem:[%s244 + $0x1f0] sm:$0xff]
        %v450 = vld [vmem:[%s244 + $0x1f8] sm:$0xff]
        %v451 = vld [vmem:[#allocation5] sm:$0xf]
        %v452 = vld [vmem:[#allocation5 + $0x4] sm:$0xf]
        %v453 = vld [vmem:[#allocation5 + $0x8] sm:$0xf]
        %v454 = vld [vmem:[#allocation5 + $0xc] sm:$0xf]
        %v455 = vld [vmem:[#allocation5 + $0x10] sm:$0xf]
        %v456 = vld [vmem:[#allocation5 + $0x14] sm:$0xf]
        %v457 = vld [vmem:[#allocation5 + $0x18] sm:$0xf]
        %v458 = vld [vmem:[#allocation5 + $0x1c] sm:$0xf]
        %v459 = vld [vmem:[#allocation5 + $0x20] sm:$0xf]
        %v460 = vld [vmem:[#allocation5 + $0x24] sm:$0xf]
        %v461 = vld [vmem:[#allocation5 + $0x28] sm:$0xf]
        %v462 = vld [vmem:[#allocation5 + $0x2c] sm:$0xf]
        %v463 = vld [vmem:[#allocation5 + $0x30] sm:$0xf]
        %v464 = vld [vmem:[#allocation5 + $0x34] sm:$0xf]
        %v465 = vld [vmem:[#allocation5 + $0x38] sm:$0xf]
        %v466 = vld [vmem:[#allocation5 + $0x3c] sm:$0xf]
        %v531 = vunpack.c.l.b16 %v323
        %v532 = vunpack.c.l.b16 %v324
        %v533 = vunpack.c.l.b16 %v325
        %v534 = vunpack.c.l.b16 %v326
        %v535 = vunpack.c.l.b16 %v327
        %v536 = vunpack.c.l.b16 %v328
        %v537 = vunpack.c.l.b16 %v329
        %v538 = vunpack.c.l.b16 %v330
        %v539 = vunpack.c.l.b16 %v331
        %v540 = vunpack.c.l.b16 %v332
        %v541 = vunpack.c.l.b16 %v333
        %v542 = vunpack.c.l.b16 %v334
        %v543 = vunpack.c.l.b16 %v335
        %v544 = vunpack.c.l.b16 %v336
        %v545 = vunpack.c.l.b16 %v337
        %v546 = vunpack.c.l.b16 %v338
        %v547 = vunpack.c.l.b16 %v339
        %v548 = vunpack.c.l.b16 %v340
        %v549 = vunpack.c.l.b16 %v341
        %v550 = vunpack.c.l.b16 %v342
        %v551 = vunpack.c.l.b16 %v343
        %v552 = vunpack.c.l.b16 %v344
        %v553 = vunpack.c.l.b16 %v345
        %v554 = vunpack.c.l.b16 %v346
        %v555 = vunpack.c.l.b16 %v347
        %v556 = vunpack.c.l.b16 %v348
        %v557 = vunpack.c.l.b16 %v349
        %v558 = vunpack.c.l.b16 %v350
        %v559 = vunpack.c.l.b16 %v351
        %v560 = vunpack.c.l.b16 %v352
        %v561 = vunpack.c.l.b16 %v353
        %v562 = vunpack.c.l.b16 %v354
        %v563 = vunpack.c.l.b16 %v355
        %v564 = vunpack.c.l.b16 %v356
        %v565 = vunpack.c.l.b16 %v357
        %v566 = vunpack.c.l.b16 %v358
        %v567 = vunpack.c.l.b16 %v359
        %v568 = vunpack.c.l.b16 %v360
        %v569 = vunpack.c.l.b16 %v361
        %v570 = vunpack.c.l.b16 %v362
        %v571 = vunpack.c.l.b16 %v363
        %v572 = vunpack.c.l.b16 %v364
        %v573 = vunpack.c.l.b16 %v365
        %v574 = vunpack.c.l.b16 %v366
        %v575 = vunpack.c.l.b16 %v367
        %v576 = vunpack.c.l.b16 %v368
        %v577 = vunpack.c.l.b16 %v369
        %v578 = vunpack.c.l.b16 %v370
        %v579 = vunpack.c.l.b16 %v371
        %v580 = vunpack.c.l.b16 %v372
        %v581 = vunpack.c.l.b16 %v373
        %v582 = vunpack.c.l.b16 %v374
        %v583 = vunpack.c.l.b16 %v375
        %v584 = vunpack.c.l.b16 %v376
        %v585 = vunpack.c.l.b16 %v377
        %v586 = vunpack.c.l.b16 %v378
        %v587 = vunpack.c.l.b16 %v379
        %v588 = vunpack.c.l.b16 %v380
        %v589 = vunpack.c.l.b16 %v381
        %v590 = vunpack.c.l.b16 %v382
        %v591 = vunpack.c.l.b16 %v383
        %v592 = vunpack.c.l.b16 %v384
        %v593 = vunpack.c.l.b16 %v385
        %v594 = vunpack.c.l.b16 %v386
        %v595 = vpack.c.b16 %v532, %v531
        %v596 = vpack.c.b16 %v534, %v533
        %v597 = vpack.c.b16 %v536, %v535
        %v598 = vpack.c.b16 %v538, %v537
        %v599 = vpack.c.b16 %v540, %v539
        %v600 = vpack.c.b16 %v542, %v541
        %v601 = vpack.c.b16 %v544, %v543
        %v602 = vpack.c.b16 %v546, %v545
        %v603 = vpack.c.b16 %v548, %v547
        %v604 = vpack.c.b16 %v550, %v549
        %v605 = vpack.c.b16 %v552, %v551
        %v606 = vpack.c.b16 %v554, %v553
        %v607 = vpack.c.b16 %v556, %v555
        %v608 = vpack.c.b16 %v558, %v557
        %v609 = vpack.c.b16 %v560, %v559
        %v610 = vpack.c.b16 %v562, %v561
        %v611 = vpack.c.b16 %v564, %v563
        %v612 = vpack.c.b16 %v566, %v565
        %v613 = vpack.c.b16 %v568, %v567
        %v614 = vpack.c.b16 %v570, %v569
        %v615 = vpack.c.b16 %v572, %v571
        %v616 = vpack.c.b16 %v574, %v573
        %v617 = vpack.c.b16 %v576, %v575
        %v618 = vpack.c.b16 %v578, %v577
        %v619 = vpack.c.b16 %v580, %v579
        %v620 = vpack.c.b16 %v582, %v581
        %v621 = vpack.c.b16 %v584, %v583
        %v622 = vpack.c.b16 %v586, %v585
        %v623 = vpack.c.b16 %v588, %v587
        %v624 = vpack.c.b16 %v590, %v589
        %v625 = vpack.c.b16 %v592, %v591
        %v626 = vpack.c.b16 %v594, %v593
        %v675 = vunpack.c.l.b16 %v451
        %v676 = vunpack.c.l.b16 %v452
        %v677 = vunpack.c.l.b16 %v453
        %v678 = vunpack.c.l.b16 %v454
        %v679 = vunpack.c.l.b16 %v455
        %v680 = vunpack.c.l.b16 %v456
        %v681 = vunpack.c.l.b16 %v457
        %v682 = vunpack.c.l.b16 %v458
        %v683 = vunpack.c.l.b16 %v459
        %v684 = vunpack.c.l.b16 %v460
        %v685 = vunpack.c.l.b16 %v461
        %v686 = vunpack.c.l.b16 %v462
        %v687 = vunpack.c.l.b16 %v463
        %v688 = vunpack.c.l.b16 %v464
        %v689 = vunpack.c.l.b16 %v465
        %v690 = vunpack.c.l.b16 %v466
        %v691 = vpack.c.b16 %v676, %v675
        %v692 = vpack.c.b16 %v678, %v677
        %v693 = vpack.c.b16 %v680, %v679
        %v694 = vpack.c.b16 %v682, %v681
        %v695 = vpack.c.b16 %v684, %v683
        %v696 = vpack.c.b16 %v686, %v685
        %v697 = vpack.c.b16 %v688, %v687
        %v698 = vpack.c.b16 %v690, %v689
        %707 = vmatprep.subr.bf16.mxu0 0
        %708 = vmatpush1.bf16.msra.mxu0 %v691
        %709 = vmatprep.subr.bf16.mxu0 0
        %710 = vmatpush1.bf16.msra.mxu0 %v692
        %711 = vmatprep.subr.bf16.mxu0 0
        %712 = vmatpush1.bf16.msra.mxu0 %v693
        %713 = vmatprep.subr.bf16.mxu0 0
        %714 = vmatpush1.bf16.msra.mxu0 %v694
        %715 = vmatprep.subr.bf16.mxu0 0
        %716 = vmatpush1.bf16.msra.mxu0 %v695
        %717 = vmatprep.subr.bf16.mxu0 0
        %718 = vmatpush1.bf16.msra.mxu0 %v696
        %719 = vmatprep.subr.bf16.mxu0 0
        %720 = vmatpush1.bf16.msra.mxu0 %v697
        %721 = vmatprep.subr.bf16.mxu0 0
        %722 = vmatpush1.bf16.msra.mxu0 %v698
        %723 = vmatprep.subr.bf16.mxu0 0
        %724 = vmatpush1.bf16.msra.mxu0 0
        %725 = vmatprep.subr.bf16.mxu0 0
        %726 = vmatpush1.bf16.msra.mxu0 0
        %727 = vmatprep.subr.bf16.mxu0 0
        %728 = vmatpush1.bf16.msra.mxu0 0
        %729 = vmatprep.subr.bf16.mxu0 0
        %730 = vmatpush1.bf16.msra.mxu0 0
        %731 = vmatprep.subr.bf16.mxu0 0
        %732 = vmatpush1.bf16.msra.mxu0 0
        %733 = vmatprep.subr.bf16.mxu0 0
        %734 = vmatpush1.bf16.msra.mxu0 0
        %735 = vmatprep.subr.bf16.mxu0 0
        %736 = vmatpush1.bf16.msra.mxu0 0
        %737 = vmatprep.subr.bf16.mxu0 0
        %738 = vmatpush1.bf16.msra.mxu0 0
        %739 = vmatprep.mubr.bf16.mxu0 0
        %740 = vmatmul.mubr.bf16.gmra.mrb[0].mxu0 %v595
        %v741 = vpop.f32.mrb[0].mxu0
        %v742 = vadd.f32 0.0, %v741
        %v743 = vpop.f32.mrb[0].mxu0
        %v744 = vpop.f32.mrb[0].mxu0
        %v745 = vadd.f32 0.0, %v744
        %v746 = vpop.f32.mrb[0].mxu0
        %747 = vmatprep.mubr.bf16.mxu0 0
        %748 = vmatmul.mubr.bf16.gmra.mrb[0].mxu0 %v596
        %v749 = vpop.f32.mrb[0].mxu0
        %v750 = vadd.f32 0.0, %v749
        %v751 = vpop.f32.mrb[0].mxu0
        %v752 = vpop.f32.mrb[0].mxu0
        %v753 = vadd.f32 0.0, %v752
        %v754 = vpop.f32.mrb[0].mxu0
        %755 = vmatprep.mubr.bf16.mxu0 0
        %756 = vmatmul.mubr.bf16.gmra.mrb[0].mxu0 %v597
        %v757 = vpop.f32.mrb[0].mxu0
        %v758 = vadd.f32 0.0, %v757
        %v759 = vpop.f32.mrb[0].mxu0
        %v760 = vpop.f32.mrb[0].mxu0
        %v761 = vadd.f32 0.0, %v760
        %v762 = vpop.f32.mrb[0].mxu0
        %763 = vmatprep.mubr.bf16.mxu0 0
        %764 = vmatmul.mubr.bf16.gmra.mrb[0].mxu0 %v598
        %v765 = vpop.f32.mrb[0].mxu0
        %v766 = vadd.f32 0.0, %v765
        %v767 = vpop.f32.mrb[0].mxu0
        %v768 = vpop.f32.mrb[0].mxu0
        %v769 = vadd.f32 0.0, %v768
        %v770 = vpop.f32.mrb[0].mxu0
        %771 = vmatprep.mubr.bf16.mxu0 0
        %772 = vmatmul.mubr.bf16.gmra.mrb[0].mxu0 %v599
        %v773 = vpop.f32.mrb[0].mxu0
        %v774 = vadd.f32 0.0, %v773
        %v775 = vpop.f32.mrb[0].mxu0
        %v776 = vpop.f32.mrb[0].mxu0
        %v777 = vadd.f32 0.0, %v776
        %v778 = vpop.f32.mrb[0].mxu0
        %779 = vmatprep.mubr.bf16.mxu0 0
        %780 = vmatmul.mubr.bf16.gmra.mrb[0].mxu0 %v600
        %v781 = vpop.f32.mrb[0].mxu0
        %v782 = vadd.f32 0.0, %v781
        %v783 = vpop.f32.mrb[0].mxu0
        %v784 = vpop.f32.mrb[0].mxu0
        %v785 = vadd.f32 0.0, %v784
        %v786 = vpop.f32.mrb[0].mxu0
        %787 = vmatprep.mubr.bf16.mxu0 0
        %788 = vmatmul.mubr.bf16.gmra.mrb[0].mxu0 %v601
        %v789 = vpop.f32.mrb[0].mxu0
        %v790 = vadd.f32 0.0, %v789
        %v791 = vpop.f32.mrb[0].mxu0
        %v792 = vpop.f32.mrb[0].mxu0
        %v793 = vadd.f32 0.0, %v792
        %v794 = vpop.f32.mrb[0].mxu0
        %795 = vmatprep.mubr.bf16.mxu0 0
        %796 = vmatmul.mubr.bf16.gmra.mrb[0].mxu0 %v602
        %v797 = vpop.f32.mrb[0].mxu0
        %v798 = vadd.f32 0.0, %v797
        %v799 = vpop.f32.mrb[0].mxu0
        %v800 = vpop.f32.mrb[0].mxu0
        %v801 = vadd.f32 0.0, %v800
        %v802 = vpop.f32.mrb[0].mxu0
        %803 = vmatprep.mubr.bf16.mxu0 0
        %804 = vmatmul.mubr.bf16.gmra.mrb[0].mxu0 %v603
        %v805 = vpop.f32.mrb[0].mxu0
        %v806 = vadd.f32 0.0, %v805
        %v807 = vpop.f32.mrb[0].mxu0
        %v808 = vpop.f32.mrb[0].mxu0
        %v809 = vadd.f32 0.0, %v808
        %v810 = vpop.f32.mrb[0].mxu0
        %811 = vmatprep.mubr.bf16.mxu0 0
        %812 = vmatmul.mubr.bf16.gmra.mrb[0].mxu0 %v604
        %v813 = vpop.f32.mrb[0].mxu0
        %v814 = vadd.f32 0.0, %v813
        %v815 = vpop.f32.mrb[0].mxu0
        %v816 = vpop.f32.mrb[0].mxu0
        %v817 = vadd.f32 0.0, %v816
        %v818 = vpop.f32.mrb[0].mxu0
        %819 = vmatprep.mubr.bf16.mxu0 0
        %820 = vmatmul.mubr.bf16.gmra.mrb[0].mxu0 %v605
        %v821 = vpop.f32.mrb[0].mxu0
        %v822 = vadd.f32 0.0, %v821
        %v823 = vpop.f32.mrb[0].mxu0
        %v824 = vpop.f32.mrb[0].mxu0
        %v825 = vadd.f32 0.0, %v824
        %v826 = vpop.f32.mrb[0].mxu0
        %827 = vmatprep.mubr.bf16.mxu0 0
        %828 = vmatmul.mubr.bf16.gmra.mrb[0].mxu0 %v606
        %v829 = vpop.f32.mrb[0].mxu0
        %v830 = vadd.f32 0.0, %v829
        %v831 = vpop.f32.mrb[0].mxu0
        %v832 = vpop.f32.mrb[0].mxu0
        %v833 = vadd.f32 0.0, %v832
        %v834 = vpop.f32.mrb[0].mxu0
        %835 = vmatprep.mubr.bf16.mxu0 0
        %836 = vmatmul.mubr.bf16.gmra.mrb[0].mxu0 %v607
        %v837 = vpop.f32.mrb[0].mxu0
        %v838 = vadd.f32 0.0, %v837
        %v839 = vpop.f32.mrb[0].mxu0
        %v840 = vpop.f32.mrb[0].mxu0
        %v841 = vadd.f32 0.0, %v840
        %v842 = vpop.f32.mrb[0].mxu0
        %843 = vmatprep.mubr.bf16.mxu0 0
        %844 = vmatmul.mubr.bf16.gmra.mrb[0].mxu0 %v608
        %v845 = vpop.f32.mrb[0].mxu0
        %v846 = vadd.f32 0.0, %v845
        %v847 = vpop.f32.mrb[0].mxu0
        %v848 = vpop.f32.mrb[0].mxu0
        %v849 = vadd.f32 0.0, %v848
        %v850 = vpop.f32.mrb[0].mxu0
        %851 = vmatprep.mubr.bf16.mxu0 0
        %852 = vmatmul.mubr.bf16.gmra.mrb[0].mxu0 %v609
        %v853 = vpop.f32.mrb[0].mxu0
        %v854 = vadd.f32 0.0, %v853
        %v855 = vpop.f32.mrb[0].mxu0
        %v856 = vpop.f32.mrb[0].mxu0
        %v857 = vadd.f32 0.0, %v856
        %v858 = vpop.f32.mrb[0].mxu0
        %859 = vmatprep.mubr.bf16.mxu0 0
        %860 = vmatmul.mubr.bf16.gmra.mrb[0].mxu0 %v610
        %v861 = vpop.f32.mrb[0].mxu0
        %v862 = vadd.f32 0.0, %v861
        %v863 = vpop.f32.mrb[0].mxu0
        %v864 = vpop.f32.mrb[0].mxu0
        %v865 = vadd.f32 0.0, %v864
        %v866 = vpop.f32.mrb[0].mxu0
        %867 = vmatprep.mubr.bf16.mxu0 0
        %868 = vmatmul.mubr.bf16.gmra.mrb[0].mxu0 %v611
        %v869 = vpop.f32.mrb[0].mxu0
        %v870 = vadd.f32 0.0, %v869
        %v871 = vpop.f32.mrb[0].mxu0
        %v872 = vpop.f32.mrb[0].mxu0
        %v873 = vadd.f32 0.0, %v872
        %v874 = vpop.f32.mrb[0].mxu0
        %875 = vmatprep.mubr.bf16.mxu0 0
        %876 = vmatmul.mubr.bf16.gmra.mrb[0].mxu0 %v612
        %v877 = vpop.f32.mrb[0].mxu0
        %v878 = vadd.f32 0.0, %v877
        %v879 = vpop.f32.mrb[0].mxu0
        %v880 = vpop.f32.mrb[0].mxu0
        %v881 = vadd.f32 0.0, %v880
        %v882 = vpop.f32.mrb[0].mxu0
        %883 = vmatprep.mubr.bf16.mxu0 0
        %884 = vmatmul.mubr.bf16.gmra.mrb[0].mxu0 %v613
        %v885 = vpop.f32.mrb[0].mxu0
        %v886 = vadd.f32 0.0, %v885
        %v887 = vpop.f32.mrb[0].mxu0
        %v888 = vpop.f32.mrb[0].mxu0
        %v889 = vadd.f32 0.0, %v888
        %v890 = vpop.f32.mrb[0].mxu0
        %891 = vmatprep.mubr.bf16.mxu0 0
        %892 = vmatmul.mubr.bf16.gmra.mrb[0].mxu0 %v614
        %v893 = vpop.f32.mrb[0].mxu0
        %v894 = vadd.f32 0.0, %v893
        %v895 = vpop.f32.mrb[0].mxu0
        %v896 = vpop.f32.mrb[0].mxu0
        %v897 = vadd.f32 0.0, %v896
        %v898 = vpop.f32.mrb[0].mxu0
        %899 = vmatprep.mubr.bf16.mxu0 0
        %900 = vmatmul.mubr.bf16.gmra.mrb[0].mxu0 %v615
        %v901 = vpop.f32.mrb[0].mxu0
        %v902 = vadd.f32 0.0, %v901
        %v903 = vpop.f32.mrb[0].mxu0
        %v904 = vpop.f32.mrb[0].mxu0
        %v905 = vadd.f32 0.0, %v904
        %v906 = vpop.f32.mrb[0].mxu0
        %907 = vmatprep.mubr.bf16.mxu0 0
        %908 = vmatmul.mubr.bf16.gmra.mrb[0].mxu0 %v616
        %v909 = vpop.f32.mrb[0].mxu0
        %v910 = vadd.f32 0.0, %v909
        %v911 = vpop.f32.mrb[0].mxu0
        %v912 = vpop.f32.mrb[0].mxu0
        %v913 = vadd.f32 0.0, %v912
        %v914 = vpop.f32.mrb[0].mxu0
        %915 = vmatprep.mubr.bf16.mxu0 0
        %916 = vmatmul.mubr.bf16.gmra.mrb[0].mxu0 %v617
        %v917 = vpop.f32.mrb[0].mxu0
        %v918 = vadd.f32 0.0, %v917
        %v919 = vpop.f32.mrb[0].mxu0
        %v920 = vpop.f32.mrb[0].mxu0
        %v921 = vadd.f32 0.0, %v920
        %v922 = vpop.f32.mrb[0].mxu0
        %923 = vmatprep.mubr.bf16.mxu0 0
        %924 = vmatmul.mubr.bf16.gmra.mrb[0].mxu0 %v618
        %v925 = vpop.f32.mrb[0].mxu0
        %v926 = vadd.f32 0.0, %v925
        %v927 = vpop.f32.mrb[0].mxu0
        %v928 = vpop.f32.mrb[0].mxu0
        %v929 = vadd.f32 0.0, %v928
        %v930 = vpop.f32.mrb[0].mxu0
        %931 = vmatprep.mubr.bf16.mxu0 0
        %932 = vmatmul.mubr.bf16.gmra.mrb[0].mxu0 %v619
        %v933 = vpop.f32.mrb[0].mxu0
        %v934 = vadd.f32 0.0, %v933
        %v935 = vpop.f32.mrb[0].mxu0
        %v936 = vpop.f32.mrb[0].mxu0
        %v937 = vadd.f32 0.0, %v936
        %v938 = vpop.f32.mrb[0].mxu0
        %939 = vmatprep.mubr.bf16.mxu0 0
        %940 = vmatmul.mubr.bf16.gmra.mrb[0].mxu0 %v620
        %v941 = vpop.f32.mrb[0].mxu0
        %v942 = vadd.f32 0.0, %v941
        %v943 = vpop.f32.mrb[0].mxu0
        %v944 = vpop.f32.mrb[0].mxu0
        %v945 = vadd.f32 0.0, %v944
        %v946 = vpop.f32.mrb[0].mxu0
        %947 = vmatprep.mubr.bf16.mxu0 0
        %948 = vmatmul.mubr.bf16.gmra.mrb[0].mxu0 %v621
        %v949 = vpop.f32.mrb[0].mxu0
        %v950 = vadd.f32 0.0, %v949
        %v951 = vpop.f32.mrb[0].mxu0
        %v952 = vpop.f32.mrb[0].mxu0
        %v953 = vadd.f32 0.0, %v952
        %v954 = vpop.f32.mrb[0].mxu0
        %955 = vmatprep.mubr.bf16.mxu0 0
        %956 = vmatmul.mubr.bf16.gmra.mrb[0].mxu0 %v622
        %v957 = vpop.f32.mrb[0].mxu0
        %v958 = vadd.f32 0.0, %v957
        %v959 = vpop.f32.mrb[0].mxu0
        %v960 = vpop.f32.mrb[0].mxu0
        %v961 = vadd.f32 0.0, %v960
        %v962 = vpop.f32.mrb[0].mxu0
        %963 = vmatprep.mubr.bf16.mxu0 0
        %964 = vmatmul.mubr.bf16.gmra.mrb[0].mxu0 %v623
        %v965 = vpop.f32.mrb[0].mxu0
        %v966 = vadd.f32 0.0, %v965
        %v967 = vpop.f32.mrb[0].mxu0
        %v968 = vpop.f32.mrb[0].mxu0
        %v969 = vadd.f32 0.0, %v968
        %v970 = vpop.f32.mrb[0].mxu0
        %971 = vmatprep.mubr.bf16.mxu0 0
        %972 = vmatmul.mubr.bf16.gmra.mrb[0].mxu0 %v624
        %v973 = vpop.f32.mrb[0].mxu0
        %v974 = vadd.f32 0.0, %v973
        %v975 = vpop.f32.mrb[0].mxu0
        %v976 = vpop.f32.mrb[0].mxu0
        %v977 = vadd.f32 0.0, %v976
        %v978 = vpop.f32.mrb[0].mxu0
        %979 = vmatprep.mubr.bf16.mxu0 0
        %980 = vmatmul.mubr.bf16.gmra.mrb[0].mxu0 %v625
        %v981 = vpop.f32.mrb[0].mxu0
        %v982 = vadd.f32 0.0, %v981
        %v983 = vpop.f32.mrb[0].mxu0
        %v984 = vpop.f32.mrb[0].mxu0
        %v985 = vadd.f32 0.0, %v984
        %v986 = vpop.f32.mrb[0].mxu0
        %987 = vmatprep.mubr.bf16.mxu0 0
        %988 = vmatmul.mubr.bf16.gmra.mrb[0].mxu0 %v626
        %v989 = vpop.f32.mrb[0].mxu0
        %v990 = vadd.f32 0.0, %v989
        %v991 = vpop.f32.mrb[0].mxu0
        %v992 = vpop.f32.mrb[0].mxu0
        %v993 = vadd.f32 0.0, %v992
        %v994 = vpop.f32.mrb[0].mxu0
        %995 = vdwg.mxu0
        %v996 = vadd.f32 %v387, %v742
        %v997 = vadd.f32 %v388, %v745
        %v998 = vadd.f32 %v389, %v750
        %v999 = vadd.f32 %v390, %v753
        %v1000 = vadd.f32 %v391, %v758
        %v1001 = vadd.f32 %v392, %v761
        %v1002 = vadd.f32 %v393, %v766
        %v1003 = vadd.f32 %v394, %v769
        %v1004 = vadd.f32 %v395, %v774
        %v1005 = vadd.f32 %v396, %v777
        %v1006 = vadd.f32 %v397, %v782
        %v1007 = vadd.f32 %v398, %v785
        %v1008 = vadd.f32 %v399, %v790
        %v1009 = vadd.f32 %v400, %v793
        %v1010 = vadd.f32 %v401, %v798
        %v1011 = vadd.f32 %v402, %v801
        %v1012 = vadd.f32 %v403, %v806
        %v1013 = vadd.f32 %v404, %v809
        %v1014 = vadd.f32 %v405, %v814
        %v1015 = vadd.f32 %v406, %v817
        %v1016 = vadd.f32 %v407, %v822
        %v1017 = vadd.f32 %v408, %v825
        %v1018 = vadd.f32 %v409, %v830
        %v1019 = vadd.f32 %v410, %v833
        %v1020 = vadd.f32 %v411, %v838
        %v1021 = vadd.f32 %v412, %v841
        %v1022 = vadd.f32 %v413, %v846
        %v1023 = vadd.f32 %v414, %v849
        %v1024 = vadd.f32 %v415, %v854
        %v1025 = vadd.f32 %v416, %v857
        %v1026 = vadd.f32 %v417, %v862
        %v1027 = vadd.f32 %v418, %v865
        %v1028 = vadd.f32 %v419, %v870
        %v1029 = vadd.f32 %v420, %v873
        %v1030 = vadd.f32 %v421, %v878
        %v1031 = vadd.f32 %v422, %v881
        %v1032 = vadd.f32 %v423, %v886
        %v1033 = vadd.f32 %v424, %v889
        %v1034 = vadd.f32 %v425, %v894
        %v1035 = vadd.f32 %v426, %v897
        %v1036 = vadd.f32 %v427, %v902
        %v1037 = vadd.f32 %v428, %v905
        %v1038 = vadd.f32 %v429, %v910
        %v1039 = vadd.f32 %v430, %v913
        %v1040 = vadd.f32 %v431, %v918
        %v1041 = vadd.f32 %v432, %v921
        %v1042 = vadd.f32 %v433, %v926
        %v1043 = vadd.f32 %v434, %v929
        %v1044 = vadd.f32 %v435, %v934
        %v1045 = vadd.f32 %v436, %v937
        %v1046 = vadd.f32 %v437, %v942
        %v1047 = vadd.f32 %v438, %v945
        %v1048 = vadd.f32 %v439, %v950
        %v1049 = vadd.f32 %v440, %v953
        %v1050 = vadd.f32 %v441, %v958
        %v1051 = vadd.f32 %v442, %v961
        %v1052 = vadd.f32 %v443, %v966
        %v1053 = vadd.f32 %v444, %v969
        %v1054 = vadd.f32 %v445, %v974
        %v1055 = vadd.f32 %v446, %v977
        %v1056 = vadd.f32 %v447, %v982
        %v1057 = vadd.f32 %v448, %v985
        %v1058 = vadd.f32 %v449, %v990
        %v1059 = vadd.f32 %v450, %v993
        %1060 = vst [vmem:[%s244] sm:$0xff] %v996
        %1061 = vst [vmem:[%s244 + $0x8] sm:$0xff] %v997
        %1062 = vst [vmem:[%s244 + $0x10] sm:$0xff] %v998
        %1063 = vst [vmem:[%s244 + $0x18] sm:$0xff] %v999
        %1064 = vst [vmem:[%s244 + $0x20] sm:$0xff] %v1000
        %1065 = vst [vmem:[%s244 + $0x28] sm:$0xff] %v1001
        %1066 = vst [vmem:[%s244 + $0x30] sm:$0xff] %v1002
        %1067 = vst [vmem:[%s244 + $0x38] sm:$0xff] %v1003
        %1068 = vst [vmem:[%s244 + $0x40] sm:$0xff] %v1004
        %1069 = vst [vmem:[%s244 + $0x48] sm:$0xff] %v1005
        %1070 = vst [vmem:[%s244 + $0x50] sm:$0xff] %v1006
        %1071 = vst [vmem:[%s244 + $0x58] sm:$0xff] %v1007
        %1072 = vst [vmem:[%s244 + $0x60] sm:$0xff] %v1008
        %1073 = vst [vmem:[%s244 + $0x68] sm:$0xff] %v1009
        %1074 = vst [vmem:[%s244 + $0x70] sm:$0xff] %v1010
        %1075 = vst [vmem:[%s244 + $0x78] sm:$0xff] %v1011
        %1076 = vst [vmem:[%s244 + $0x80] sm:$0xff] %v1012
        %1077 = vst [vmem:[%s244 + $0x88] sm:$0xff] %v1013
        %1078 = vst [vmem:[%s244 + $0x90] sm:$0xff] %v1014
        %1079 = vst [vmem:[%s244 + $0x98] sm:$0xff] %v1015
        %1080 = vst [vmem:[%s244 + $0xa0] sm:$0xff] %v1016
        %1081 = vst [vmem:[%s244 + $0xa8] sm:$0xff] %v1017
        %1082 = vst [vmem:[%s244 + $0xb0] sm:$0xff] %v1018
        %1083 = vst [vmem:[%s244 + $0xb8] sm:$0xff] %v1019
        %1084 = vst [vmem:[%s244 + $0xc0] sm:$0xff] %v1020
        %1085 = vst [vmem:[%s244 + $0xc8] sm:$0xff] %v1021
        %1086 = vst [vmem:[%s244 + $0xd0] sm:$0xff] %v1022
        %1087 = vst [vmem:[%s244 + $0xd8] sm:$0xff] %v1023
        %1088 = vst [vmem:[%s244 + $0xe0] sm:$0xff] %v1024
        %1089 = vst [vmem:[%s244 + $0xe8] sm:$0xff] %v1025
        %1090 = vst [vmem:[%s244 + $0xf0] sm:$0xff] %v1026
        %1091 = vst [vmem:[%s244 + $0xf8] sm:$0xff] %v1027
        %1092 = vst [vmem:[%s244 + $0x100] sm:$0xff] %v1028
        %1093 = vst [vmem:[%s244 + $0x108] sm:$0xff] %v1029
        %1094 = vst [vmem:[%s244 + $0x110] sm:$0xff] %v1030
        %1095 = vst [vmem:[%s244 + $0x118] sm:$0xff] %v1031
        %1096 = vst [vmem:[%s244 + $0x120] sm:$0xff] %v1032
        %1097 = vst [vmem:[%s244 + $0x128] sm:$0xff] %v1033
        %1098 = vst [vmem:[%s244 + $0x130] sm:$0xff] %v1034
        %1099 = vst [vmem:[%s244 + $0x138] sm:$0xff] %v1035
        %1100 = vst [vmem:[%s244 + $0x140] sm:$0xff] %v1036
        %1101 = vst [vmem:[%s244 + $0x148] sm:$0xff] %v1037
        %1102 = vst [vmem:[%s244 + $0x150] sm:$0xff] %v1038
        %1103 = vst [vmem:[%s244 + $0x158] sm:$0xff] %v1039
        %1104 = vst [vmem:[%s244 + $0x160] sm:$0xff] %v1040
        %1105 = vst [vmem:[%s244 + $0x168] sm:$0xff] %v1041
        %1106 = vst [vmem:[%s244 + $0x170] sm:$0xff] %v1042
        %1107 = vst [vmem:[%s244 + $0x178] sm:$0xff] %v1043
        %1108 = vst [vmem:[%s244 + $0x180] sm:$0xff] %v1044
        %1109 = vst [vmem:[%s244 + $0x188] sm:$0xff] %v1045
        %1110 = vst [vmem:[%s244 + $0x190] sm:$0xff] %v1046
        %1111 = vst [vmem:[%s244 + $0x198] sm:$0xff] %v1047
        %1112 = vst [vmem:[%s244 + $0x1a0] sm:$0xff] %v1048
        %1113 = vst [vmem:[%s244 + $0x1a8] sm:$0xff] %v1049
        %1114 = vst [vmem:[%s244 + $0x1b0] sm:$0xff] %v1050
        %1115 = vst [vmem:[%s244 + $0x1b8] sm:$0xff] %v1051
        %1116 = vst [vmem:[%s244 + $0x1c0] sm:$0xff] %v1052
        %1117 = vst [vmem:[%s244 + $0x1c8] sm:$0xff] %v1053
        %1118 = vst [vmem:[%s244 + $0x1d0] sm:$0xff] %v1054
        %1119 = vst [vmem:[%s244 + $0x1d8] sm:$0xff] %v1055
        %1120 = vst [vmem:[%s244 + $0x1e0] sm:$0xff] %v1056
        %1121 = vst [vmem:[%s244 + $0x1e8] sm:$0xff] %v1057
        %1122 = vst [vmem:[%s244 + $0x1f0] sm:$0xff] %v1058
        %1123 = vst [vmem:[%s244 + $0x1f8] sm:$0xff] %v1059
        // Predicated region
        $region41: #{matmul_pallas.1} parent=27 // pred_check
          %p1124 = pneg %p255
        $region42: #{matmul_pallas.1} parent=27 // pred_check_branch
          %1126 = sbr.rel (%p1124) target = $region44
        $region43: #{matmul_pallas.1} parent=27 // pred_region
          %v1127 = vld [vmem:[%s244] sm:$0xff]
          %v1128 = vld [vmem:[%s244 + $0x8] sm:$0xff]
          %v1129 = vld [vmem:[%s244 + $0x10] sm:$0xff]
          %v1130 = vld [vmem:[%s244 + $0x18] sm:$0xff]
          %v1131 = vld [vmem:[%s244 + $0x20] sm:$0xff]
          %v1132 = vld [vmem:[%s244 + $0x28] sm:$0xff]
          %v1133 = vld [vmem:[%s244 + $0x30] sm:$0xff]
          %v1134 = vld [vmem:[%s244 + $0x38] sm:$0xff]
          %v1135 = vld [vmem:[%s244 + $0x40] sm:$0xff]
          %v1136 = vld [vmem:[%s244 + $0x48] sm:$0xff]
          %v1137 = vld [vmem:[%s244 + $0x50] sm:$0xff]
          %v1138 = vld [vmem:[%s244 + $0x58] sm:$0xff]
          %v1139 = vld [vmem:[%s244 + $0x60] sm:$0xff]
          %v1140 = vld [vmem:[%s244 + $0x68] sm:$0xff]
          %v1141 = vld [vmem:[%s244 + $0x70] sm:$0xff]
          %v1142 = vld [vmem:[%s244 + $0x78] sm:$0xff]
          %v1143 = vld [vmem:[%s244 + $0x80] sm:$0xff]
          %v1144 = vld [vmem:[%s244 + $0x88] sm:$0xff]
          %v1145 = vld [vmem:[%s244 + $0x90] sm:$0xff]
          %v1146 = vld [vmem:[%s244 + $0x98] sm:$0xff]
          %v1147 = vld [vmem:[%s244 + $0xa0] sm:$0xff]
          %v1148 = vld [vmem:[%s244 + $0xa8] sm:$0xff]
          %v1149 = vld [vmem:[%s244 + $0xb0] sm:$0xff]
          %v1150 = vld [vmem:[%s244 + $0xb8] sm:$0xff]
          %v1151 = vld [vmem:[%s244 + $0xc0] sm:$0xff]
          %v1152 = vld [vmem:[%s244 + $0xc8] sm:$0xff]
          %v1153 = vld [vmem:[%s244 + $0xd0] sm:$0xff]
          %v1154 = vld [vmem:[%s244 + $0xd8] sm:$0xff]
          %v1155 = vld [vmem:[%s244 + $0xe0] sm:$0xff]
          %v1156 = vld [vmem:[%s244 + $0xe8] sm:$0xff]
          %v1157 = vld [vmem:[%s244 + $0xf0] sm:$0xff]
          %v1158 = vld [vmem:[%s244 + $0xf8] sm:$0xff]
          %v1159 = vld [vmem:[%s244 + $0x100] sm:$0xff]
          %v1160 = vld [vmem:[%s244 + $0x108] sm:$0xff]
          %v1161 = vld [vmem:[%s244 + $0x110] sm:$0xff]
          %v1162 = vld [vmem:[%s244 + $0x118] sm:$0xff]
          %v1163 = vld [vmem:[%s244 + $0x120] sm:$0xff]
          %v1164 = vld [vmem:[%s244 + $0x128] sm:$0xff]
          %v1165 = vld [vmem:[%s244 + $0x130] sm:$0xff]
          %v1166 = vld [vmem:[%s244 + $0x138] sm:$0xff]
          %v1167 = vld [vmem:[%s244 + $0x140] sm:$0xff]
          %v1168 = vld [vmem:[%s244 + $0x148] sm:$0xff]
          %v1169 = vld [vmem:[%s244 + $0x150] sm:$0xff]
          %v1170 = vld [vmem:[%s244 + $0x158] sm:$0xff]
          %v1171 = vld [vmem:[%s244 + $0x160] sm:$0xff]
          %v1172 = vld [vmem:[%s244 + $0x168] sm:$0xff]
          %v1173 = vld [vmem:[%s244 + $0x170] sm:$0xff]
          %v1174 = vld [vmem:[%s244 + $0x178] sm:$0xff]
          %v1175 = vld [vmem:[%s244 + $0x180] sm:$0xff]
          %v1176 = vld [vmem:[%s244 + $0x188] sm:$0xff]
          %v1177 = vld [vmem:[%s244 + $0x190] sm:$0xff]
          %v1178 = vld [vmem:[%s244 + $0x198] sm:$0xff]
          %v1179 = vld [vmem:[%s244 + $0x1a0] sm:$0xff]
          %v1180 = vld [vmem:[%s244 + $0x1a8] sm:$0xff]
          %v1181 = vld [vmem:[%s244 + $0x1b0] sm:$0xff]
          %v1182 = vld [vmem:[%s244 + $0x1b8] sm:$0xff]
          %v1183 = vld [vmem:[%s244 + $0x1c0] sm:$0xff]
          %v1184 = vld [vmem:[%s244 + $0x1c8] sm:$0xff]
          %v1185 = vld [vmem:[%s244 + $0x1d0] sm:$0xff]
          %v1186 = vld [vmem:[%s244 + $0x1d8] sm:$0xff]
          %v1187 = vld [vmem:[%s244 + $0x1e0] sm:$0xff]
          %v1188 = vld [vmem:[%s244 + $0x1e8] sm:$0xff]
          %v1189 = vld [vmem:[%s244 + $0x1f0] sm:$0xff]
          %v1190 = vld [vmem:[%s244 + $0x1f8] sm:$0xff]
          %v1191 = vmul.f32 %v1127, %v1127
          %v1192 = vmul.f32 %v1128, %v1128
          %v1193 = vmul.f32 %v1129, %v1129
          %v1194 = vmul.f32 %v1130, %v1130
          %v1195 = vmul.f32 %v1131, %v1131
          %v1196 = vmul.f32 %v1132, %v1132
          %v1197 = vmul.f32 %v1133, %v1133
          %v1198 = vmul.f32 %v1134, %v1134
          %v1199 = vmul.f32 %v1135, %v1135
          %v1200 = vmul.f32 %v1136, %v1136
          %v1201 = vmul.f32 %v1137, %v1137
          %v1202 = vmul.f32 %v1138, %v1138
          %v1203 = vmul.f32 %v1139, %v1139
          %v1204 = vmul.f32 %v1140, %v1140
          %v1205 = vmul.f32 %v1141, %v1141
          %v1206 = vmul.f32 %v1142, %v1142
          %v1207 = vmul.f32 %v1143, %v1143
          %v1208 = vmul.f32 %v1144, %v1144
          %v1209 = vmul.f32 %v1145, %v1145
          %v1210 = vmul.f32 %v1146, %v1146
          %v1211 = vmul.f32 %v1147, %v1147
          %v1212 = vmul.f32 %v1148, %v1148
          %v1213 = vmul.f32 %v1149, %v1149
          %v1214 = vmul.f32 %v1150, %v1150
          %v1215 = vmul.f32 %v1151, %v1151
          %v1216 = vmul.f32 %v1152, %v1152
          %v1217 = vmul.f32 %v1153, %v1153
          %v1218 = vmul.f32 %v1154, %v1154
          %v1219 = vmul.f32 %v1155, %v1155
          %v1220 = vmul.f32 %v1156, %v1156
          %v1221 = vmul.f32 %v1157, %v1157
          %v1222 = vmul.f32 %v1158, %v1158
          %v1223 = vmul.f32 %v1159, %v1159
          %v1224 = vmul.f32 %v1160, %v1160
          %v1225 = vmul.f32 %v1161, %v1161
          %v1226 = vmul.f32 %v1162, %v1162
          %v1227 = vmul.f32 %v1163, %v1163
          %v1228 = vmul.f32 %v1164, %v1164
          %v1229 = vmul.f32 %v1165, %v1165
          %v1230 = vmul.f32 %v1166, %v1166
          %v1231 = vmul.f32 %v1167, %v1167
          %v1232 = vmul.f32 %v1168, %v1168
          %v1233 = vmul.f32 %v1169, %v1169
          %v1234 = vmul.f32 %v1170, %v1170
          %v1235 = vmul.f32 %v1171, %v1171
          %v1236 = vmul.f32 %v1172, %v1172
          %v1237 = vmul.f32 %v1173, %v1173
          %v1238 = vmul.f32 %v1174, %v1174
          %v1239 = vmul.f32 %v1175, %v1175
          %v1240 = vmul.f32 %v1176, %v1176
          %v1241 = vmul.f32 %v1177, %v1177
          %v1242 = vmul.f32 %v1178, %v1178
          %v1243 = vmul.f32 %v1179, %v1179
          %v1244 = vmul.f32 %v1180, %v1180
          %v1245 = vmul.f32 %v1181, %v1181
          %v1246 = vmul.f32 %v1182, %v1182
          %v1247 = vmul.f32 %v1183, %v1183
          %v1248 = vmul.f32 %v1184, %v1184
          %v1249 = vmul.f32 %v1185, %v1185
          %v1250 = vmul.f32 %v1186, %v1186
          %v1251 = vmul.f32 %v1187, %v1187
          %v1252 = vmul.f32 %v1188, %v1188
          %v1253 = vmul.f32 %v1189, %v1189
          %v1254 = vmul.f32 %v1190, %v1190
          %v1255 = vadd.f32 %v1191, %v1192
          %v1256 = vadd.f32 %v1255, %v1193
          %v1257 = vadd.f32 %v1256, %v1194
          %v1258 = vadd.f32 %v1257, %v1195
          %v1259 = vadd.f32 %v1258, %v1196
          %v1260 = vadd.f32 %v1259, %v1197
          %v1261 = vadd.f32 %v1260, %v1198
          %v1262 = vadd.f32 %v1261, %v1199
          %v1263 = vadd.f32 %v1262, %v1200
          %v1264 = vadd.f32 %v1263, %v1201
          %v1265 = vadd.f32 %v1264, %v1202
          %v1266 = vadd.f32 %v1265, %v1203
          %v1267 = vadd.f32 %v1266, %v1204
          %v1268 = vadd.f32 %v1267, %v1205
          %v1269 = vadd.f32 %v1268, %v1206
          %v1270 = vadd.f32 %v1269, %v1207
          %v1271 = vadd.f32 %v1270, %v1208
          %v1272 = vadd.f32 %v1271, %v1209
          %v1273 = vadd.f32 %v1272, %v1210
          %v1274 = vadd.f32 %v1273, %v1211
          %v1275 = vadd.f32 %v1274, %v1212
          %v1276 = vadd.f32 %v1275, %v1213
          %v1277 = vadd.f32 %v1276, %v1214
          %v1278 = vadd.f32 %v1277, %v1215
          %v1279 = vadd.f32 %v1278, %v1216
          %v1280 = vadd.f32 %v1279, %v1217
          %v1281 = vadd.f32 %v1280, %v1218
          %v1282 = vadd.f32 %v1281, %v1219
          %v1283 = vadd.f32 %v1282, %v1220
          %v1284 = vadd.f32 %v1283, %v1221
          %v1285 = vadd.f32 %v1284, %v1222
          %v1286 = vadd.f32 %v1285, %v1223
          %v1287 = vadd.f32 %v1286, %v1224
          %v1288 = vadd.f32 %v1287, %v1225
          %v1289 = vadd.f32 %v1288, %v1226
          %v1290 = vadd.f32 %v1289, %v1227
          %v1291 = vadd.f32 %v1290, %v1228
          %v1292 = vadd.f32 %v1291, %v1229
          %v1293 = vadd.f32 %v1292, %v1230
          %v1294 = vadd.f32 %v1293, %v1231
          %v1295 = vadd.f32 %v1294, %v1232
          %v1296 = vadd.f32 %v1295, %v1233
          %v1297 = vadd.f32 %v1296, %v1234
          %v1298 = vadd.f32 %v1297, %v1235
          %v1299 = vadd.f32 %v1298, %v1236
          %v1300 = vadd.f32 %v1299, %v1237
          %v1301 = vadd.f32 %v1300, %v1238
          %v1302 = vadd.f32 %v1301, %v1239
          %v1303 = vadd.f32 %v1302, %v1240
          %v1304 = vadd.f32 %v1303, %v1241
          %v1305 = vadd.f32 %v1304, %v1242
          %v1306 = vadd.f32 %v1305, %v1243
          %v1307 = vadd.f32 %v1306, %v1244
          %v1308 = vadd.f32 %v1307, %v1245
          %v1309 = vadd.f32 %v1308, %v1246
          %v1310 = vadd.f32 %v1309, %v1247
          %v1311 = vadd.f32 %v1310, %v1248
          %v1312 = vadd.f32 %v1311, %v1249
          %v1313 = vadd.f32 %v1312, %v1250
          %v1314 = vadd.f32 %v1313, %v1251
          %v1315 = vadd.f32 %v1314, %v1252
          %v1316 = vadd.f32 %v1315, %v1253
          %v1317 = vadd.f32 %v1316, %v1254
          %v1318 = vrot.slane %v1317, 4
          %v1319 = vadd.f32 %v1317, %v1318
          %v1320 = vrot.slane %v1319, 2
          %v1321 = vadd.f32 %v1319, %v1320
          %v1322 = vrot.slane %v1321, 1
          %v1323 = vadd.f32 %v1321, %v1322
          %1324 = vst [vmem:[%s250] sm:$0x1] %v1323
        $region44: #{matmul_pallas.1} parent=27 // pred_fallthru
          _
        %s1325 = sand.u32 %s110, 1
        %s1326 = scalar_lea.sflag [#allocation4], %s1325
        %s1327 = sand.u32 %s110, 1
        %s1328 = smul.addr %s1327, 512
        %s1329 = scalar_lea.vmem [#allocation7], %s1328
        %s1330 = sand.u32 %s138, 1
        %s1331 = scalar_lea.sflag [#allocation9], %s1330
        %s1332 = sand.u32 %s138, 1
        %s1333 = scalar_lea.vmem [#allocation8], %s1332
        // Predicated region
        $region45: #{matmul_pallas.1} parent=27 // pred_check
          %p1334 = pneg %p120
        $region46: #{matmul_pallas.1} parent=27 // pred_check_branch
          %1336 = sbr.rel (%p1334) target = $region48
        $region47: #{matmul_pallas.1} parent=27 // pred_region
          %s1337 = smul.u32 64, %s30
          %s1339 = ssub.s32 8192, 8192
          %1340 = vsyncadd %s1326, %s1339
          %s1341 = sadd.s32 %s31, %s1337
          %s1342 = smul.addr %s1341, 128
          %s1343 = scalar_lea.hbm %s2, %s1342
          %s1344 = sshll.u32 %s1329, 4
          %s1345 = int_to_ptr.vmem [resolvable:$true] %s1344
          %1350 = dma.vmem_to_hbm [thread:$0]  %s1345, 8192, %s1343, %s1326, 128, 128, 8
        $region48: #{matmul_pallas.1} parent=27 // pred_fallthru
          _
        // Predicated region
        $region49: #{matmul_pallas.1} parent=27 // pred_check
          %p1351 = pneg %p148
        $region50: #{matmul_pallas.1} parent=27 // pred_check_branch
          %1353 = sbr.rel (%p1351) target = $region52
        $region51: #{matmul_pallas.1} parent=27 // pred_region
          %s1355 = ssub.s32 16, 16
          %1356 = vsyncadd %s1331, %s1355
          %s1357 = sadd.s32 %s31, %s30
          %s1358 = smul.addr %s1357, 16
          %s1359 = scalar_lea.hbm %s3, %s1358
          %s1361 = sshll.u32 %s1333, 4
          %s1362 = int_to_ptr.vmem [resolvable:$true] %s1361
          %1364 = dma.vmem_to_hbm [thread:$0]  %s1362, 16, %s1359, %s1331
        $region52: #{matmul_pallas.1} parent=27 // pred_fallthru
          _
      $region28: #{matmul_pallas.1} parent=5 // pred_fallthru
        _
      %p1365 = scmp.le.s32.totalorder 2, %s20
      // Predicated region
      $region53: #{matmul_pallas.1} parent=5 // pred_check
        %p1366 = pneg %p1365
      $region54: #{matmul_pallas.1} parent=5 // pred_check_branch
        %1368 = sbr.rel (%p1366) target = $region56
      $region55: #{matmul_pallas.1} parent=5 // pred_region
        %s1369 = ssub.s32 %s20, 2
        // Predicated region
        $region57: #{matmul_pallas.1} parent=55 // pred_check
          %p1370 = pneg %p126
        $region58: #{matmul_pallas.1} parent=55 // pred_check_branch
          %1372 = sbr.rel (%p1370) target = $region60
        $region59: #{matmul_pallas.1} parent=55 // pred_region
          %s1373 = sand.u32 %s111, 1
          %s1374 = scalar_lea.sflag [#allocation4], %s1373
          %s1375 = sand.u32 %s111, 1
          %s1376 = smul.addr %s1375, 512
          %s1377 = scalar_lea.vmem [#allocation7], %s1376
          %1378 = dma.done %s1374, 8192
        $region60: #{matmul_pallas.1} parent=55 // pred_fallthru
          _
        // Predicated region
        $region61: #{matmul_pallas.1} parent=55 // pred_check
          %p1379 = pneg %p154
        $region62: #{matmul_pallas.1} parent=55 // pred_check_branch
          %1381 = sbr.rel (%p1379) target = $region64
        $region63: #{matmul_pallas.1} parent=55 // pred_region
          %s1382 = sand.u32 %s139, 1
          %s1383 = scalar_lea.sflag [#allocation9], %s1382
          %s1384 = sand.u32 %s139, 1
          %s1385 = scalar_lea.vmem [#allocation8], %s1384
          %1386 = dma.done %s1383, 16
        $region64: #{matmul_pallas.1} parent=55 // pred_fallthru
          _
      $region56: #{matmul_pallas.1} parent=5 // pred_fallthru
        _
    $region6: #{matmul_pallas.1} parent=1 // loop_footer
      %s24 = sadd.s32 1, %s20
    $region7: #{matmul_pallas.1} parent=1 // loop_footer_branch
      %19 = sbr.rel target = $region3
    $region8: #{matmul_pallas.1} parent=1 // loop_exit
      _
    %1387 = vsyncpa [#allocation3], 1
    %s1388 = scalar_lea.sflag [#allocation3], 1
    %1389 = vsyncpa %s1388, 1
    %1390 = vsyncpa [#allocation6], 1
    %1391 = vsyncpa [#allocation4], 1
    %s1392 = scalar_lea.sflag [#allocation4], 1
    %1393 = vsyncpa %s1392, 1
    %1394 = vsyncpa [#allocation9], 1
    %s1395 = scalar_lea.sflag [#allocation9], 1
    %1396 = vsyncpa %s1395, 1

</llo_original>
